<compile_context>
chip_gen: v7x
topology: tpu7x:2x2x1
jax: 0.10.0
libtpu: 0.0.40
codegen_flags: <defaults>
</compile_context>

<pallas_src>
import jax
import jax.numpy as jnp
from jax import lax
from jax.experimental import pallas as pl
from jax.experimental.pallas import tpu as pltpu

LATENT_D = 32
HIDDEN = 512
NUM_JOINTS = 23
OUT_DIM = NUM_JOINTS * 9       # 207
OUT_PAD = 256                  # lane-dense padded fc3 width (multiple of 128)


def _round_up(n, m):
    return ((n + m - 1) // m) * m


# ---------------------------------------------------------------------------
# Pallas kernel: the 3-layer MLP (matmul hot path), batch-tiled.
# ---------------------------------------------------------------------------
def _mlp_kernel(x_ref, w1_ref, b1_ref, w2_ref, b2_ref, w3_ref, b3_ref, o_ref):
    x = x_ref[...]                                          # (tb, 32) bf16

    h1 = jnp.dot(x, w1_ref[...], preferred_element_type=jnp.float32) + b1_ref[...]
    h1 = jnp.maximum(h1, 0.2 * h1)                          # leaky_relu(., 0.2)
    # F.dropout(p=0.25, training=False) -> identity in eval mode.

    h2 = jnp.dot(h1.astype(jnp.bfloat16), w2_ref[...],
                 preferred_element_type=jnp.float32) + b2_ref[...]
    h2 = jnp.maximum(h2, 0.2 * h2)                          # leaky_relu(., 0.2)

    h3 = jnp.dot(h2.astype(jnp.bfloat16), w3_ref[...],
                 preferred_element_type=jnp.float32) + b3_ref[...]
    o_ref[...] = jnp.tanh(h3)


def mlp_forward(x, w1, b1, w2, b2, w3, b3, *, tile_b=1024):
    """fc1 -> leaky_relu -> fc2 -> leaky_relu -> fc3 -> tanh, returns (B, 207) f32.

    tile_b default of 1024 is safe on v5e/v6e/v7x; bump to 2048-4096 on v6e for
    slightly better per-step overhead amortization if the batch is huge.
    """
    B = x.shape[0]

    # bf16 MXU-native matmul inputs (f32 accumulate inside the kernel).
    xb = x.astype(jnp.bfloat16)
    w1b = w1.astype(jnp.bfloat16)
    w2b = w2.astype(jnp.bfloat16)
    # Lane-dense padded fc3: zero-padded columns 207..255 (sliced off below).
    w3p = jnp.pad(w3, ((0, 0), (0, OUT_PAD - OUT_DIM))).astype(jnp.bfloat16)
    b3p = jnp.pad(b3, ((0, 0), (0, OUT_PAD - OUT_DIM)))     # stays f32

    # Batch tile: multiple of 8 sublanes, bounded by tile_b; pad B up to it.
    tb = min(tile_b, _round_up(B, 8))
    b_pad = _round_up(B, tb)
    if b_pad != B:
        xb = jnp.pad(xb, ((0, b_pad - B), (0, 0)))
    grid = (b_pad // tb,)

    const = lambda i: (0, 0)   # weights/biases: VMEM-resident, DMA'd once
    grid_spec = pltpu.PrefetchScalarGridSpec(
        num_scalar_prefetch=0,
        grid=grid,
        in_specs=[
            pl.BlockSpec((tb, LATENT_D), lambda i: (i, 0)),   # x tile
            pl.BlockSpec((LATENT_D, HIDDEN), const),          # w1
            pl.BlockSpec((1, HIDDEN), const),                 # b1
            pl.BlockSpec((HIDDEN, HIDDEN), const),            # w2
            pl.BlockSpec((1, HIDDEN), const),                 # b2
            pl.BlockSpec((HIDDEN, OUT_PAD), const),           # w3 (padded)
            pl.BlockSpec((1, OUT_PAD), const),                # b3 (padded)
        ],
        out_specs=pl.BlockSpec((tb, OUT_PAD), lambda i: (i, 0)),
    )

    flops = 2 * b_pad * (LATENT_D * HIDDEN + HIDDEN * HIDDEN + HIDDEN * OUT_PAD)
    bytes_accessed = (
        xb.size * 2 + w1b.size * 2 + w2b.size * 2 + w3p.size * 2
        + b1.size * 4 + b2.size * 4 + b3p.size * 4
        + b_pad * OUT_PAD * 4
    )

    out = pl.pallas_call(
        _mlp_kernel,
        out_shape=jax.ShapeDtypeStruct((b_pad, OUT_PAD), jnp.float32),
        grid_spec=grid_spec,
        compiler_params=pltpu.CompilerParams(
            dimension_semantics=("parallel",),       # megacore shard on v7x
            vmem_limit_bytes=48 * 1024 * 1024,       # headroom under v7x 64 MiB
        ),
        cost_estimate=pl.CostEstimate(
            flops=flops,
            bytes_accessed=bytes_accessed,
            transcendentals=b_pad * OUT_PAD,         # tanh
        ),
    )(xb, w1b, b1, w2b, b2, w3p, b3p)

    return out[:B, :OUT_DIM]


# ---------------------------------------------------------------------------
# Plain-JAX glue: polar projection (replaces batched SVD) + angle-axis.
# ---------------------------------------------------------------------------
def _bmm3(a, b):
    # Batched (N,3,3) @ (N,3,3).
    return jnp.einsum('nij,njk->nik', a, b)


def polar_orthogonalize(a, iters=30):
    """Orthogonal polar factor of each 3x3 matrix.

    For full-rank A = U S V^T this equals U @ V^T, i.e. exactly what the
    reference computes via per-matrix torch.svd.  Newton-Schulz iteration:
    X <- 1.5 X - 0.5 X X^T X, after scaling A so its singular values are in
    (0, 1] (Frobenius-norm normalization; the polar factor is scale-invariant).
    Rank-deficient matrices (measure-zero for tanh(MLP) outputs) may differ
    from the SVD result, matching the review's noted caveat.
    """
    norm = jnp.sqrt(jnp.sum(a * a, axis=(-2, -1), keepdims=True)) + 1e-8
    x0 = a / norm

    def body(_, x):
        return 1.5 * x - 0.5 * _bmm3(_bmm3(x, jnp.swapaxes(x, -1, -2)), x)

    return lax.fori_loop(0, iters, body, x0)


def rotation_matrix_to_quaternion(rotation_matrix, eps=1e-6):
    # rotation_matrix: (N, 3, 4) -- mirrors torchgeometry exactly.
    rmat_t = jnp.transpose(rotation_matrix, (0, 2, 1))  # (N, 4, 3)

    mask_d2 = rmat_t[:, 2, 2] < eps
    mask_d0_d1 = rmat_t[:, 0, 0] > rmat_t[:, 1, 1]
    mask_d0_nd1 = rmat_t[:, 0, 0] < -rmat_t[:, 1, 1]

    t0 = 1 + rmat_t[:, 0, 0] - rmat_t[:, 1, 1] - rmat_t[:, 2, 2]
    q0 = jnp.stack([rmat_t[:, 1, 2] - rmat_t[:, 2, 1],
                    t0,
                    rmat_t[:, 0, 1] + rmat_t[:, 1, 0],
                    rmat_t[:, 2, 0] + rmat_t[:, 0, 2]], -1)

    t1 = 1 - rmat_t[:, 0, 0] + rmat_t[:, 1, 1] - rmat_t[:, 2, 2]
    q1 = jnp.stack([rmat_t[:, 2, 0] - rmat_t[:, 0, 2],
                    rmat_t[:, 0, 1] + rmat_t[:, 1, 0],
                    t1,
                    rmat_t[:, 1, 2] + rmat_t[:, 2, 1]], -1)

    t2 = 1 - rmat_t[:, 0, 0] - rmat_t[:, 1, 1] + rmat_t[:, 2, 2]
    q2 = jnp.stack([rmat_t[:, 0, 1] - rmat_t[:, 1, 0],
                    rmat_t[:, 2, 0] + rmat_t[:, 0, 2],
                    rmat_t[:, 1, 2] + rmat_t[:, 2, 1],
                    t2], -1)

    t3 = 1 + rmat_t[:, 0, 0] + rmat_t[:, 1, 1] + rmat_t[:, 2, 2]
    q3 = jnp.stack([t3,
                    rmat_t[:, 1, 2] - rmat_t[:, 2, 1],
                    rmat_t[:, 2, 0] - rmat_t[:, 0, 2],
                    rmat_t[:, 0, 1] - rmat_t[:, 1, 0]], -1)

    f32 = q0.dtype
    mask_c0 = (mask_d2 & mask_d0_d1).astype(f32)[:, None]
    mask_c1 = (mask_d2 & ~mask_d0_d1).astype(f32)[:, None]
    mask_c2 = (~mask_d2 & mask_d0_nd1).astype(f32)[:, None]
    mask_c3 = (~mask_d2 & ~mask_d0_nd1).astype(f32)[:, None]

    q = q0 * mask_c0 + q1 * mask_c1 + q2 * mask_c2 + q3 * mask_c3
    denom = jnp.sqrt(t0[:, None] * mask_c0 + t1[:, None] * mask_c1 +
                     t2[:, None] * mask_c2 + t3[:, None] * mask_c3)
    q = q / denom
    q = q * 0.5
    return q


def quaternion_to_angle_axis(quaternion):
    q1 = quaternion[..., 1]
    q2 = quaternion[..., 2]
    q3 = quaternion[..., 3]
    sin_squared_theta = q1 * q1 + q2 * q2 + q3 * q3

    sin_theta = jnp.sqrt(sin_squared_theta)
    cos_theta = quaternion[..., 0]
    two_theta = 2.0 * jnp.where(cos_theta < 0.0,
                                jnp.arctan2(-sin_theta, -cos_theta),
                                jnp.arctan2(sin_theta, cos_theta))

    # Safe denominator: avoids inf/NaN in the unselected branch (grad safety).
    safe_sin = jnp.where(sin_squared_theta > 0.0, sin_theta, 1.0)
    k_pos = two_theta / safe_sin
    k_neg = 2.0 * jnp.ones_like(sin_theta)
    k = jnp.where(sin_squared_theta > 0.0, k_pos, k_neg)

    return jnp.stack([q1 * k, q2 * k, q3 * k], -1)


def rotation_matrix_to_angle_axis(rotation_matrix):
    quaternion = rotation_matrix_to_quaternion(rotation_matrix)
    return quaternion_to_angle_axis(quaternion)


# ---------------------------------------------------------------------------
# Full vposer_decoder forward
# ---------------------------------------------------------------------------
def vposer_decoder_forward(x, params):
    B = x.shape[0]
    fc3_out = mlp_forward(x, *params)                       # (B, 207), Pallas
    output = fc3_out.reshape(-1, 3, 3)                      # (B*23, 3, 3)

    # Reference: per-matrix torch.svd then U @ V^T == orthogonal polar factor.
    # Computed with a Newton-Schulz polar iteration (no batched SVD on TPU).
    # TODO(synk): polar projection + angle-axis stay as vectorized plain-JAX
    # glue rather than being fused into the Pallas kernel (per-3x3 cross-lane
    # layout); the expensive jnp.linalg.svd is eliminated.
    norm_rotation = polar_orthogonalize(output)

    # correct_rot = norm_rotation - output.detach() + output -> forward value
    # equals norm_rotation (the detach trick only changes gradients).
    correct_rot = norm_rotation

    padded = jnp.pad(correct_rot, ((0, 0), (0, 0), (0, 1)))  # F.pad [0,1,0,0]
    aa = rotation_matrix_to_angle_axis(padded)               # (B*23, 3)
    return aa.reshape(B, -1)                                 # (B, 69)


def init_params(key):
    k1, k2, k3, k4, k5, k6 = jax.random.split(key, 6)
    # Weights stored pre-transposed: (in_features, out_features), f32 master
    # copies (cast to bf16 at kernel entry).
    w1 = jax.random.normal(k1, (LATENT_D, HIDDEN), jnp.float32) * 0.05
    b1 = jax.random.normal(k2, (1, HIDDEN), jnp.float32) * 0.01
    w2 = jax.random.normal(k3, (HIDDEN, HIDDEN), jnp.float32) * 0.05
    b2 = jax.random.normal(k4, (1, HIDDEN), jnp.float32) * 0.01
    w3 = jax.random.normal(k5, (HIDDEN, OUT_DIM), jnp.float32) * 0.05
    b3 = jax.random.normal(k6, (1, OUT_DIM), jnp.float32) * 0.01
    return (w1, b1, w2, b2, w3, b3)


if __name__ == "__main__":
    key = jax.random.PRNGKey(0)
    pkey, xkey = jax.random.split(key)
    params = init_params(pkey)

    batch = 2
    x = jax.random.normal(xkey, (batch, LATENT_D), jnp.float32)

    out = jax.jit(vposer_decoder_forward)(x, params)
    out = jax.block_until_ready(out)

    assert out.shape == (batch, NUM_JOINTS * 3), out.shape
    assert out.dtype == jnp.float32
    assert bool(jnp.all(jnp.isfinite(out)))
    print("KERNEL_OK")
</pallas_src>

<mosaic_0001>
module attributes {stable_mosaic.version = 11 : i64} {
  func.func @_mlp_kernel(%arg0: i32, %arg1: memref<8x32xbf16, #tpu.memory_space<vmem>>, %arg2: memref<32x512xbf16, #tpu.memory_space<vmem>>, %arg3: memref<1x512xf32, #tpu.memory_space<vmem>>, %arg4: memref<512x512xbf16, #tpu.memory_space<vmem>>, %arg5: memref<1x512xf32, #tpu.memory_space<vmem>>, %arg6: memref<512x256xbf16, #tpu.memory_space<vmem>>, %arg7: memref<1x256xf32, #tpu.memory_space<vmem>>, %arg8: memref<8x256xf32, #tpu.memory_space<vmem>>) attributes {dimension_semantics = [#tpu.dimension_semantics<parallel>], iteration_bounds = array<i64: 1>, scalar_prefetch = 0 : i64, scratch_operands = 0 : i64, tpu.core_type = #tpu.core_type<tc>, window_params = [{transform_indices = @transform_0, window_bounds = array<i64: 8, 32>}, {pipeline_mode = #tpu.pipeline_mode<synchronous>, transform_indices = @transform_1, window_bounds = array<i64: 32, 512>}, {pipeline_mode = #tpu.pipeline_mode<synchronous>, transform_indices = @transform_2, window_bounds = array<i64: 1, 512>}, {pipeline_mode = #tpu.pipeline_mode<synchronous>, transform_indices = @transform_3, window_bounds = array<i64: 512, 512>}, {pipeline_mode = #tpu.pipeline_mode<synchronous>, transform_indices = @transform_4, window_bounds = array<i64: 1, 512>}, {pipeline_mode = #tpu.pipeline_mode<synchronous>, transform_indices = @transform_5, window_bounds = array<i64: 512, 256>}, {pipeline_mode = #tpu.pipeline_mode<synchronous>, transform_indices = @transform_6, window_bounds = array<i64: 1, 256>}, {transform_indices = @transform_7, window_bounds = array<i64: 8, 256>}]} {
    %c0 = arith.constant 0 : index
    %c0_0 = arith.constant 0 : index
    %0 = vector.load %arg1[%c0, %c0_0] : memref<8x32xbf16, #tpu.memory_space<vmem>>, vector<8x32xbf16>
    %c0_1 = arith.constant 0 : index
    %c0_2 = arith.constant 0 : index
    %1 = vector.load %arg2[%c0_1, %c0_2] : memref<32x512xbf16, #tpu.memory_space<vmem>>, vector<32x512xbf16>
    %cst = arith.constant dense<0.000000e+00> : vector<8x512xf32>
    %2 = tpu.matmul %0, %1, %cst {dimension_numbers = #tpu.dot_dimension_numbers<[1], [0], [0], [1], [0, 0, 1, 1], [], []>} : vector<8x32xbf16>, vector<32x512xbf16>, vector<8x512xf32> -> vector<8x512xf32>
    %c0_3 = arith.constant 0 : index
    %c0_4 = arith.constant 0 : index
    %3 = vector.load %arg3[%c0_3, %c0_4] : memref<1x512xf32, #tpu.memory_space<vmem>>, vector<1x512xf32>
    %4 = vector.broadcast %3 : vector<1x512xf32> to vector<8x512xf32>
    %5 = arith.addf %2, %4 : vector<8x512xf32>
    %cst_5 = arith.constant 2.000000e-01 : f32
    %6 = vector.broadcast %cst_5 : f32 to vector<8x512xf32>
    %7 = arith.mulf %6, %5 : vector<8x512xf32>
    %8 = arith.maximumf %5, %7 : vector<8x512xf32>
    %9 = arith.truncf %8 : vector<8x512xf32> to vector<8x512xbf16>
    %c0_6 = arith.constant 0 : index
    %c0_7 = arith.constant 0 : index
    %10 = vector.load %arg4[%c0_6, %c0_7] : memref<512x512xbf16, #tpu.memory_space<vmem>>, vector<512x512xbf16>
    %cst_8 = arith.constant dense<0.000000e+00> : vector<8x512xf32>
    %11 = tpu.matmul %9, %10, %cst_8 {dimension_numbers = #tpu.dot_dimension_numbers<[1], [0], [0], [1], [0, 0, 1, 1], [], []>} : vector<8x512xbf16>, vector<512x512xbf16>, vector<8x512xf32> -> vector<8x512xf32>
    %c0_9 = arith.constant 0 : index
    %c0_10 = arith.constant 0 : index
    %12 = vector.load %arg5[%c0_9, %c0_10] : memref<1x512xf32, #tpu.memory_space<vmem>>, vector<1x512xf32>
    %13 = vector.broadcast %12 : vector<1x512xf32> to vector<8x512xf32>
    %14 = arith.addf %11, %13 : vector<8x512xf32>
    %cst_11 = arith.constant 2.000000e-01 : f32
    %15 = vector.broadcast %cst_11 : f32 to vector<8x512xf32>
    %16 = arith.mulf %15, %14 : vector<8x512xf32>
    %17 = arith.maximumf %14, %16 : vector<8x512xf32>
    %18 = arith.truncf %17 : vector<8x512xf32> to vector<8x512xbf16>
    %c0_12 = arith.constant 0 : index
    %c0_13 = arith.constant 0 : index
    %19 = vector.load %arg6[%c0_12, %c0_13] : memref<512x256xbf16, #tpu.memory_space<vmem>>, vector<512x256xbf16>
    %cst_14 = arith.constant dense<0.000000e+00> : vector<8x256xf32>
    %20 = tpu.matmul %18, %19, %cst_14 {dimension_numbers = #tpu.dot_dimension_numbers<[1], [0], [0], [1], [0, 0, 1, 1], [], []>} : vector<8x512xbf16>, vector<512x256xbf16>, vector<8x256xf32> -> vector<8x256xf32>
    %c0_15 = arith.constant 0 : index
    %c0_16 = arith.constant 0 : index
    %21 = vector.load %arg7[%c0_15, %c0_16] : memref<1x256xf32, #tpu.memory_space<vmem>>, vector<1x256xf32>
    %22 = vector.broadcast %21 : vector<1x256xf32> to vector<8x256xf32>
    %23 = arith.addf %20, %22 : vector<8x256xf32>
    %24 = math.tanh %23 : vector<8x256xf32>
    %c0_17 = arith.constant 0 : index
    %c0_18 = arith.constant 0 : index
    %25 = vector.load %arg8[%c0_17, %c0_18] : memref<8x256xf32, #tpu.memory_space<vmem>>, vector<8x256xf32>
    tpu.vector_store %arg8[%c0_17, %c0_18], %24 {strides = array<i32>} : memref<8x256xf32, #tpu.memory_space<vmem>>, vector<8x256xf32>,
    return
  }
  func.func @transform_0(%arg0: i32) -> (i32, i32) {
    %c0_i32 = arith.constant 0 : i32
    %c0_i32_0 = arith.constant 0 : i32
    return %arg0, %c0_i32 : i32, i32
  }
  func.func @transform_1(%arg0: i32) -> (i32, i32) {
    %c0_i32 = arith.constant 0 : i32
    %c0_i32_0 = arith.constant 0 : i32
    %c0_i32_1 = arith.constant 0 : i32
    return %c0_i32, %c0_i32_0 : i32, i32
  }
  func.func @transform_2(%arg0: i32) -> (i32, i32) {
    %c0_i32 = arith.constant 0 : i32
    %c0_i32_0 = arith.constant 0 : i32
    %c0_i32_1 = arith.constant 0 : i32
    return %c0_i32, %c0_i32_0 : i32, i32
  }
  func.func @transform_3(%arg0: i32) -> (i32, i32) {
    %c0_i32 = arith.constant 0 : i32
    %c0_i32_0 = arith.constant 0 : i32
    %c0_i32_1 = arith.constant 0 : i32
    return %c0_i32, %c0_i32_0 : i32, i32
  }
  func.func @transform_4(%arg0: i32) -> (i32, i32) {
    %c0_i32 = arith.constant 0 : i32
    %c0_i32_0 = arith.constant 0 : i32
    %c0_i32_1 = arith.constant 0 : i32
    return %c0_i32, %c0_i32_0 : i32, i32
  }
  func.func @transform_5(%arg0: i32) -> (i32, i32) {
    %c0_i32 = arith.constant 0 : i32
    %c0_i32_0 = arith.constant 0 : i32
    %c0_i32_1 = arith.constant 0 : i32
    return %c0_i32, %c0_i32_0 : i32, i32
  }
  func.func @transform_6(%arg0: i32) -> (i32, i32) {
    %c0_i32 = arith.constant 0 : i32
    %c0_i32_0 = arith.constant 0 : i32
    %c0_i32_1 = arith.constant 0 : i32
    return %c0_i32, %c0_i32_0 : i32, i32
  }
  func.func @transform_7(%arg0: i32) -> (i32, i32) {
    %c0_i32 = arith.constant 0 : i32
    %c0_i32_0 = arith.constant 0 : i32
    return %arg0, %c0_i32 : i32, i32
  }
}

</mosaic_0001>

<llo_original>
// kernel: vposer_decoder_forward.1
$region0: #{vposer_decoder_forward.1}
  #allocation0 [shape = 'u32[]', space=smem, size = 0x4, offset = 0x4, fixed_abs, tag = 'smem constant byte address 0x4 - core index']
  #allocation1 [shape = 'u32[144,128]{1,0:T(1,128)}', space=vmem, size = 0x12000, scoped, tag = 'internal scratch']
  %s0 = inlined_call_operand.vmem [shape: bf16[8,32], index: 0, kind: input, shape index: {}]
  %s1 = inlined_call_operand.vmem [shape: bf16[32,512], index: 1, kind: input, shape index: {}]
  %s2 = inlined_call_operand.vmem [shape: f32[1,512], index: 2, kind: input, shape index: {}]
  %s3 = inlined_call_operand.vmem [shape: bf16[512,512], index: 3, kind: input, shape index: {}]
  %s4 = inlined_call_operand.vmem [shape: f32[1,512], index: 4, kind: input, shape index: {}]
  %s5 = inlined_call_operand.vmem [shape: bf16[512,256], index: 5, kind: input, shape index: {}]
  %s6 = inlined_call_operand.vmem [shape: f32[1,256], index: 6, kind: input, shape index: {}]
  %s7 = inlined_call_operand.vmem [shape: f32[8,256], index: 7, kind: output, shape index: {}]
  %s8 = sld [smem:[#allocation0]]
  $region38: #{vposer_decoder_forward.1} parent=0
    _
  %s10 = ssub.s32 1, %s8
  %s11 = scalar_select 0, %s10, %s8
  // Predicated region
  $region2: #{vposer_decoder_forward.1} parent=0 // pred_check
    _
  $region3: #{vposer_decoder_forward.1} parent=0 // pred_check_branch
    %13 = sbr.rel (0) target = $region5
  $region4: #{vposer_decoder_forward.1} parent=0 // pred_region
    _
  $region5: #{vposer_decoder_forward.1} parent=0 // pred_fallthru
    _
  // Predicated region
  $region6: #{vposer_decoder_forward.1} parent=0 // pred_check
    _
  $region7: #{vposer_decoder_forward.1} parent=0 // pred_check_branch
    %15 = sbr.rel (0) target = $region9
  $region8: #{vposer_decoder_forward.1} parent=0 // pred_region
    _
  $region9: #{vposer_decoder_forward.1} parent=0 // pred_fallthru
    _
  // Predicated region
  $region10: #{vposer_decoder_forward.1} parent=0 // pred_check
    _
  $region11: #{vposer_decoder_forward.1} parent=0 // pred_check_branch
    %17 = sbr.rel (0) target = $region13
  $region12: #{vposer_decoder_forward.1} parent=0 // pred_region
    _
  $region13: #{vposer_decoder_forward.1} parent=0 // pred_fallthru
    _
  // Predicated region
  $region14: #{vposer_decoder_forward.1} parent=0 // pred_check
    _
  $region15: #{vposer_decoder_forward.1} parent=0 // pred_check_branch
    %19 = sbr.rel (0) target = $region17
  $region16: #{vposer_decoder_forward.1} parent=0 // pred_region
    _
  $region17: #{vposer_decoder_forward.1} parent=0 // pred_fallthru
    _
  // Predicated region
  $region18: #{vposer_decoder_forward.1} parent=0 // pred_check
    _
  $region19: #{vposer_decoder_forward.1} parent=0 // pred_check_branch
    %21 = sbr.rel (0) target = $region21
  $region20: #{vposer_decoder_forward.1} parent=0 // pred_region
    _
  $region21: #{vposer_decoder_forward.1} parent=0 // pred_fallthru
    _
  // Predicated region
  $region22: #{vposer_decoder_forward.1} parent=0 // pred_check
    _
  $region23: #{vposer_decoder_forward.1} parent=0 // pred_check_branch
    %23 = sbr.rel (0) target = $region25
  $region24: #{vposer_decoder_forward.1} parent=0 // pred_region
    _
  $region25: #{vposer_decoder_forward.1} parent=0 // pred_fallthru
    _
  // Predicated region
  $region26: #{vposer_decoder_forward.1} parent=0 // pred_check
    _
  $region27: #{vposer_decoder_forward.1} parent=0 // pred_check_branch
    %25 = sbr.rel (0) target = $region29
  $region28: #{vposer_decoder_forward.1} parent=0 // pred_region
    _
  $region29: #{vposer_decoder_forward.1} parent=0 // pred_fallthru
    _
  %v27 = vld [vmem:[%s0] sm:$0xf]
  %v28 = vld [vmem:[%s1] sm:$0xff]
  %v29 = vld [vmem:[%s1 + $0x8] sm:$0xff]
  %v30 = vld [vmem:[%s1 + $0x10] sm:$0xff]
  %v31 = vld [vmem:[%s1 + $0x18] sm:$0xff]
  %v32 = vld [vmem:[%s1 + $0x20] sm:$0xff]
  %v33 = vld [vmem:[%s1 + $0x28] sm:$0xff]
  %v34 = vld [vmem:[%s1 + $0x30] sm:$0xff]
  %v35 = vld [vmem:[%s1 + $0x38] sm:$0xff]
  %v36 = vld [vmem:[%s2] sm:$0xf]
  %v38 = vlaneseq
  %v39 = vshrl.u32 %v38, 7
  %v40 = vsub.s32 0, %v39
  %v41 = vrot.slane %v36, %v40
  %v42 = vlaneseq
  %v43 = vshrl.u32 %v42, 7
  %v44 = vsub.s32 1, %v43
  %v45 = vrot.slane %v36, %v44
  %v46 = vlaneseq
  %v47 = vshrl.u32 %v46, 7
  %v48 = vsub.s32 2, %v47
  %v49 = vrot.slane %v36, %v48
  %v50 = vlaneseq
  %v51 = vshrl.u32 %v50, 7
  %v52 = vsub.s32 3, %v51
  %v53 = vrot.slane %v36, %v52
  %v66 = vunpack.c.l.b16 %v28
  %v67 = vunpack.c.h.b16 %v28
  %v68 = vunpack.c.l.b16 %v29
  %v69 = vunpack.c.h.b16 %v29
  %v70 = vunpack.c.l.b16 %v30
  %v71 = vunpack.c.h.b16 %v30
  %v72 = vunpack.c.l.b16 %v31
  %v73 = vunpack.c.h.b16 %v31
  %v74 = vunpack.c.l.b16 %v32
  %v75 = vunpack.c.h.b16 %v32
  %v76 = vunpack.c.l.b16 %v33
  %v77 = vunpack.c.h.b16 %v33
  %v78 = vunpack.c.l.b16 %v34
  %v79 = vunpack.c.h.b16 %v34
  %v80 = vunpack.c.l.b16 %v35
  %v81 = vunpack.c.h.b16 %v35
  %v82 = vpack.c.b16 %v70, %v66
  %v83 = vpack.c.b16 %v71, %v67
  %v84 = vpack.c.b16 %v72, %v68
  %v85 = vpack.c.b16 %v73, %v69
  %v86 = vpack.c.b16 %v78, %v74
  %v87 = vpack.c.b16 %v79, %v75
  %v88 = vpack.c.b16 %v80, %v76
  %v89 = vpack.c.b16 %v81, %v77
  %vm98 = vcmask 261120
  %v100 = vsel %vm98, %v27, 0
  %102 = vmatprep.subr.bf16.mxu0 %v83
  %103 = vmatpush1.bf16.msra.mxu0 %v82
  %104 = vmatprep.subr.bf16.mxu0 %v87
  %105 = vmatpush1.bf16.msra.mxu0 %v86
  %106 = vmatprep.subr.bf16.mxu0 0
  %107 = vmatpush1.bf16.msra.mxu0 0
  %108 = vmatprep.subr.bf16.mxu0 0
  %109 = vmatpush1.bf16.msra.mxu0 0
  %110 = vmatprep.subr.bf16.mxu0 0
  %111 = vmatpush1.bf16.msra.mxu0 0
  %112 = vmatprep.subr.bf16.mxu0 0
  %113 = vmatpush1.bf16.msra.mxu0 0
  %114 = vmatprep.subr.bf16.mxu0 0
  %115 = vmatpush1.bf16.msra.mxu0 0
  %116 = vmatprep.subr.bf16.mxu0 0
  %117 = vmatpush1.bf16.msra.mxu0 0
  %118 = vmatprep.subr.bf16.mxu0 0
  %119 = vmatpush1.bf16.msra.mxu0 0
  %120 = vmatprep.subr.bf16.mxu0 0
  %121 = vmatpush1.bf16.msra.mxu0 0
  %122 = vmatprep.subr.bf16.mxu0 0
  %123 = vmatpush1.bf16.msra.mxu0 0
  %124 = vmatprep.subr.bf16.mxu0 0
  %125 = vmatpush1.bf16.msra.mxu0 0
  %126 = vmatprep.subr.bf16.mxu0 0
  %127 = vmatpush1.bf16.msra.mxu0 0
  %128 = vmatprep.subr.bf16.mxu0 0
  %129 = vmatpush1.bf16.msra.mxu0 0
  %130 = vmatprep.subr.bf16.mxu0 0
  %131 = vmatpush1.bf16.msra.mxu0 0
  %132 = vmatprep.subr.bf16.mxu0 0
  %133 = vmatpush1.bf16.msra.mxu0 0
  %134 = vmatprep.mubr.bf16.mxu0 0
  %135 = vmatmul.mubr.bf16.gmra.mrb[0].mxu0 %v100
  %v136 = vpop.f32.mrb[0].mxu0
  %v137 = vadd.f32 %v41, %v136
  %v138 = vpop.f32.mrb[0].mxu0
  %v139 = vadd.f32 %v45, %v138
  %v140 = vpop.f32.mrb[0].mxu0
  %v141 = vpop.f32.mrb[0].mxu0
  %142 = vdwg.mxu0
  %143 = vmatprep.subr.bf16.mxu0 %v85
  %144 = vmatpush1.bf16.msra.mxu0 %v84
  %145 = vmatprep.subr.bf16.mxu0 %v89
  %146 = vmatpush1.bf16.msra.mxu0 %v88
  %147 = vmatprep.subr.bf16.mxu0 0
  %148 = vmatpush1.bf16.msra.mxu0 0
  %149 = vmatprep.subr.bf16.mxu0 0
  %150 = vmatpush1.bf16.msra.mxu0 0
  %151 = vmatprep.subr.bf16.mxu0 0
  %152 = vmatpush1.bf16.msra.mxu0 0
  %153 = vmatprep.subr.bf16.mxu0 0
  %154 = vmatpush1.bf16.msra.mxu0 0
  %155 = vmatprep.subr.bf16.mxu0 0
  %156 = vmatpush1.bf16.msra.mxu0 0
  %157 = vmatprep.subr.bf16.mxu0 0
  %158 = vmatpush1.bf16.msra.mxu0 0
  %159 = vmatprep.subr.bf16.mxu0 0
  %160 = vmatpush1.bf16.msra.mxu0 0
  %161 = vmatprep.subr.bf16.mxu0 0
  %162 = vmatpush1.bf16.msra.mxu0 0
  %163 = vmatprep.subr.bf16.mxu0 0
  %164 = vmatpush1.bf16.msra.mxu0 0
  %165 = vmatprep.subr.bf16.mxu0 0
  %166 = vmatpush1.bf16.msra.mxu0 0
  %167 = vmatprep.subr.bf16.mxu0 0
  %168 = vmatpush1.bf16.msra.mxu0 0
  %169 = vmatprep.subr.bf16.mxu0 0
  %170 = vmatpush1.bf16.msra.mxu0 0
  %171 = vmatprep.subr.bf16.mxu0 0
  %172 = vmatpush1.bf16.msra.mxu0 0
  %173 = vmatprep.subr.bf16.mxu0 0
  %174 = vmatpush1.bf16.msra.mxu0 0
  %175 = vmatprep.mubr.bf16.mxu0 0
  %176 = vmatmul.mubr.bf16.gmra.mrb[0].mxu0 %v100
  %v177 = vpop.f32.mrb[0].mxu0
  %v178 = vadd.f32 %v49, %v177
  %v179 = vpop.f32.mrb[0].mxu0
  %v180 = vadd.f32 %v53, %v179
  %v181 = vpop.f32.mrb[0].mxu0
  %v182 = vpop.f32.mrb[0].mxu0
  %183 = vdwg.mxu0
  %v184 = vmul.f32 %v137, 0.2
  %v185 = vmul.f32 %v139, 0.2
  %v186 = vmul.f32 %v178, 0.2
  %v187 = vmul.f32 %v180, 0.2
  %v188 = vmax.f32 %v137, %v184
  %v189 = vmax.f32 %v139, %v185
  %v190 = vmax.f32 %v178, %v186
  %v191 = vmax.f32 %v180, %v187
  %v192 = vpack.c.bf16 %v188, %v188
  %v193 = vpack.c.bf16 %v189, %v189
  %v194 = vpack.c.bf16 %v190, %v190
  %v195 = vpack.c.bf16 %v191, %v191
  %v196 = vld [vmem:[%s3] sm:$0xff]
  %v197 = vld [vmem:[%s3 + $0x8] sm:$0xff]
  %v198 = vld [vmem:[%s3 + $0x10] sm:$0xff]
  %v199 = vld [vmem:[%s3 + $0x18] sm:$0xff]
  %v200 = vld [vmem:[%s3 + $0x20] sm:$0xff]
  %v201 = vld [vmem:[%s3 + $0x28] sm:$0xff]
  %v202 = vld [vmem:[%s3 + $0x30] sm:$0xff]
  %v203 = vld [vmem:[%s3 + $0x38] sm:$0xff]
  %v204 = vld [vmem:[%s3 + $0x40] sm:$0xff]
  %v205 = vld [vmem:[%s3 + $0x48] sm:$0xff]
  %v206 = vld [vmem:[%s3 + $0x50] sm:$0xff]
  %v207 = vld [vmem:[%s3 + $0x58] sm:$0xff]
  %v208 = vld [vmem:[%s3 + $0x60] sm:$0xff]
  %v209 = vld [vmem:[%s3 + $0x68] sm:$0xff]
  %v210 = vld [vmem:[%s3 + $0x70] sm:$0xff]
  %v211 = vld [vmem:[%s3 + $0x78] sm:$0xff]
  %v212 = vld [vmem:[%s3 + $0x80] sm:$0xff]
  %v213 = vld [vmem:[%s3 + $0x88] sm:$0xff]
  %v214 = vld [vmem:[%s3 + $0x90] sm:$0xff]
  %v215 = vld [vmem:[%s3 + $0x98] sm:$0xff]
  %v216 = vld [vmem:[%s3 + $0xa0] sm:$0xff]
  %v217 = vld [vmem:[%s3 + $0xa8] sm:$0xff]
  %v218 = vld [vmem:[%s3 + $0xb0] sm:$0xff]
  %v219 = vld [vmem:[%s3 + $0xb8] sm:$0xff]
  %v220 = vld [vmem:[%s3 + $0xc0] sm:$0xff]
  %v221 = vld [vmem:[%s3 + $0xc8] sm:$0xff]
  %v222 = vld [vmem:[%s3 + $0xd0] sm:$0xff]
  %v223 = vld [vmem:[%s3 + $0xd8] sm:$0xff]
  %v224 = vld [vmem:[%s3 + $0xe0] sm:$0xff]
  %v225 = vld [vmem:[%s3 + $0xe8] sm:$0xff]
  %v226 = vld [vmem:[%s3 + $0xf0] sm:$0xff]
  %v227 = vld [vmem:[%s3 + $0xf8] sm:$0xff]
  %v228 = vld [vmem:[%s3 + $0x100] sm:$0xff]
  %v229 = vld [vmem:[%s3 + $0x108] sm:$0xff]
  %v230 = vld [vmem:[%s3 + $0x110] sm:$0xff]
  %v231 = vld [vmem:[%s3 + $0x118] sm:$0xff]
  %v232 = vld [vmem:[%s3 + $0x120] sm:$0xff]
  %v233 = vld [vmem:[%s3 + $0x128] sm:$0xff]
  %v234 = vld [vmem:[%s3 + $0x130] sm:$0xff]
  %v235 = vld [vmem:[%s3 + $0x138] sm:$0xff]
  %v236 = vld [vmem:[%s3 + $0x140] sm:$0xff]
  %v237 = vld [vmem:[%s3 + $0x148] sm:$0xff]
  %v238 = vld [vmem:[%s3 + $0x150] sm:$0xff]
  %v239 = vld [vmem:[%s3 + $0x158] sm:$0xff]
  %v240 = vld [vmem:[%s3 + $0x160] sm:$0xff]
  %v241 = vld [vmem:[%s3 + $0x168] sm:$0xff]
  %v242 = vld [vmem:[%s3 + $0x170] sm:$0xff]
  %v243 = vld [vmem:[%s3 + $0x178] sm:$0xff]
  %v244 = vld [vmem:[%s3 + $0x180] sm:$0xff]
  %v245 = vld [vmem:[%s3 + $0x188] sm:$0xff]
  %v246 = vld [vmem:[%s3 + $0x190] sm:$0xff]
  %v247 = vld [vmem:[%s3 + $0x198] sm:$0xff]
  %v248 = vld [vmem:[%s3 + $0x1a0] sm:$0xff]
  %v249 = vld [vmem:[%s3 + $0x1a8] sm:$0xff]
  %v250 = vld [vmem:[%s3 + $0x1b0] sm:$0xff]
  %v251 = vld [vmem:[%s3 + $0x1b8] sm:$0xff]
  %v252 = vld [vmem:[%s3 + $0x1c0] sm:$0xff]
  %v253 = vld [vmem:[%s3 + $0x1c8] sm:$0xff]
  %v254 = vld [vmem:[%s3 + $0x1d0] sm:$0xff]
  %v255 = vld [vmem:[%s3 + $0x1d8] sm:$0xff]
  %v256 = vld [vmem:[%s3 + $0x1e0] sm:$0xff]
  %v257 = vld [vmem:[%s3 + $0x1e8] sm:$0xff]
  %v258 = vld [vmem:[%s3 + $0x1f0] sm:$0xff]
  %v259 = vld [vmem:[%s3 + $0x1f8] sm:$0xff]
  %v260 = vld [vmem:[%s3 + $0x200] sm:$0xff]
  %v261 = vld [vmem:[%s3 + $0x208] sm:$0xff]
  %v262 = vld [vmem:[%s3 + $0x210] sm:$0xff]
  %v263 = vld [vmem:[%s3 + $0x218] sm:$0xff]
  %v264 = vld [vmem:[%s3 + $0x220] sm:$0xff]
  %v265 = vld [vmem:[%s3 + $0x228] sm:$0xff]
  %v266 = vld [vmem:[%s3 + $0x230] sm:$0xff]
  %v267 = vld [vmem:[%s3 + $0x238] sm:$0xff]
  %v268 = vld [vmem:[%s3 + $0x240] sm:$0xff]
  %v269 = vld [vmem:[%s3 + $0x248] sm:$0xff]
  %v270 = vld [vmem:[%s3 + $0x250] sm:$0xff]
  %v271 = vld [vmem:[%s3 + $0x258] sm:$0xff]
  %v272 = vld [vmem:[%s3 + $0x260] sm:$0xff]
  %v273 = vld [vmem:[%s3 + $0x268] sm:$0xff]
  %v274 = vld [vmem:[%s3 + $0x270] sm:$0xff]
  %v275 = vld [vmem:[%s3 + $0x278] sm:$0xff]
  %v276 = vld [vmem:[%s3 + $0x280] sm:$0xff]
  %v277 = vld [vmem:[%s3 + $0x288] sm:$0xff]
  %v278 = vld [vmem:[%s3 + $0x290] sm:$0xff]
  %v279 = vld [vmem:[%s3 + $0x298] sm:$0xff]
  %v280 = vld [vmem:[%s3 + $0x2a0] sm:$0xff]
  %v281 = vld [vmem:[%s3 + $0x2a8] sm:$0xff]
  %v282 = vld [vmem:[%s3 + $0x2b0] sm:$0xff]
  %v283 = vld [vmem:[%s3 + $0x2b8] sm:$0xff]
  %v284 = vld [vmem:[%s3 + $0x2c0] sm:$0xff]
  %v285 = vld [vmem:[%s3 + $0x2c8] sm:$0xff]
  %v286 = vld [vmem:[%s3 + $0x2d0] sm:$0xff]
  %v287 = vld [vmem:[%s3 + $0x2d8] sm:$0xff]
  %v288 = vld [vmem:[%s3 + $0x2e0] sm:$0xff]
  %v289 = vld [vmem:[%s3 + $0x2e8] sm:$0xff]
  %v290 = vld [vmem:[%s3 + $0x2f0] sm:$0xff]
  %v291 = vld [vmem:[%s3 + $0x2f8] sm:$0xff]
  %v292 = vld [vmem:[%s3 + $0x300] sm:$0xff]
  %v293 = vld [vmem:[%s3 + $0x308] sm:$0xff]
  %v294 = vld [vmem:[%s3 + $0x310] sm:$0xff]
  %v295 = vld [vmem:[%s3 + $0x318] sm:$0xff]
  %v296 = vld [vmem:[%s3 + $0x320] sm:$0xff]
  %v297 = vld [vmem:[%s3 + $0x328] sm:$0xff]
  %v298 = vld [vmem:[%s3 + $0x330] sm:$0xff]
  %v299 = vld [vmem:[%s3 + $0x338] sm:$0xff]
  %v300 = vld [vmem:[%s3 + $0x340] sm:$0xff]
  %v301 = vld [vmem:[%s3 + $0x348] sm:$0xff]
  %v302 = vld [vmem:[%s3 + $0x350] sm:$0xff]
  %v303 = vld [vmem:[%s3 + $0x358] sm:$0xff]
  %v304 = vld [vmem:[%s3 + $0x360] sm:$0xff]
  %v305 = vld [vmem:[%s3 + $0x368] sm:$0xff]
  %v306 = vld [vmem:[%s3 + $0x370] sm:$0xff]
  %v307 = vld [vmem:[%s3 + $0x378] sm:$0xff]
  %v308 = vld [vmem:[%s3 + $0x380] sm:$0xff]
  %v309 = vld [vmem:[%s3 + $0x388] sm:$0xff]
  %v310 = vld [vmem:[%s3 + $0x390] sm:$0xff]
  %v311 = vld [vmem:[%s3 + $0x398] sm:$0xff]
  %v312 = vld [vmem:[%s3 + $0x3a0] sm:$0xff]
  %v313 = vld [vmem:[%s3 + $0x3a8] sm:$0xff]
  %v314 = vld [vmem:[%s3 + $0x3b0] sm:$0xff]
  %v315 = vld [vmem:[%s3 + $0x3b8] sm:$0xff]
  %v316 = vld [vmem:[%s3 + $0x3c0] sm:$0xff]
  %v317 = vld [vmem:[%s3 + $0x3c8] sm:$0xff]
  %v318 = vld [vmem:[%s3 + $0x3d0] sm:$0xff]
  %v319 = vld [vmem:[%s3 + $0x3d8] sm:$0xff]
  %v320 = vld [vmem:[%s3 + $0x3e0] sm:$0xff]
  %v321 = vld [vmem:[%s3 + $0x3e8] sm:$0xff]
  %v322 = vld [vmem:[%s3 + $0x3f0] sm:$0xff]
  %v323 = vld [vmem:[%s3 + $0x3f8] sm:$0xff]
  %v324 = vld [vmem:[%s4] sm:$0xf]
  %v326 = vlaneseq
  %v327 = vshrl.u32 %v326, 7
  %v328 = vsub.s32 0, %v327
  %v329 = vrot.slane %v324, %v328
  %v330 = vlaneseq
  %v331 = vshrl.u32 %v330, 7
  %v332 = vsub.s32 1, %v331
  %v333 = vrot.slane %v324, %v332
  %v334 = vlaneseq
  %v335 = vshrl.u32 %v334, 7
  %v336 = vsub.s32 2, %v335
  %v337 = vrot.slane %v324, %v336
  %v338 = vlaneseq
  %v339 = vshrl.u32 %v338, 7
  %v340 = vsub.s32 3, %v339
  %v341 = vrot.slane %v324, %v340
  %v474 = vunpack.c.l.b16 %v196
  %v475 = vunpack.c.h.b16 %v196
  %v476 = vunpack.c.l.b16 %v197
  %v477 = vunpack.c.h.b16 %v197
  %v478 = vunpack.c.l.b16 %v198
  %v479 = vunpack.c.h.b16 %v198
  %v480 = vunpack.c.l.b16 %v199
  %v481 = vunpack.c.h.b16 %v199
  %v482 = vunpack.c.l.b16 %v200
  %v483 = vunpack.c.h.b16 %v200
  %v484 = vunpack.c.l.b16 %v201
  %v485 = vunpack.c.h.b16 %v201
  %v486 = vunpack.c.l.b16 %v202
  %v487 = vunpack.c.h.b16 %v202
  %v488 = vunpack.c.l.b16 %v203
  %v489 = vunpack.c.h.b16 %v203
  %v490 = vunpack.c.l.b16 %v204
  %v491 = vunpack.c.h.b16 %v204
  %v492 = vunpack.c.l.b16 %v205
  %v493 = vunpack.c.h.b16 %v205
  %v494 = vunpack.c.l.b16 %v206
  %v495 = vunpack.c.h.b16 %v206
  %v496 = vunpack.c.l.b16 %v207
  %v497 = vunpack.c.h.b16 %v207
  %v498 = vunpack.c.l.b16 %v208
  %v499 = vunpack.c.h.b16 %v208
  %v500 = vunpack.c.l.b16 %v209
  %v501 = vunpack.c.h.b16 %v209
  %v502 = vunpack.c.l.b16 %v210
  %v503 = vunpack.c.h.b16 %v210
  %v504 = vunpack.c.l.b16 %v211
  %v505 = vunpack.c.h.b16 %v211
  %v506 = vunpack.c.l.b16 %v212
  %v507 = vunpack.c.h.b16 %v212
  %v508 = vunpack.c.l.b16 %v213
  %v509 = vunpack.c.h.b16 %v213
  %v510 = vunpack.c.l.b16 %v214
  %v511 = vunpack.c.h.b16 %v214
  %v512 = vunpack.c.l.b16 %v215
  %v513 = vunpack.c.h.b16 %v215
  %v514 = vunpack.c.l.b16 %v216
  %v515 = vunpack.c.h.b16 %v216
  %v516 = vunpack.c.l.b16 %v217
  %v517 = vunpack.c.h.b16 %v217
  %v518 = vunpack.c.l.b16 %v218
  %v519 = vunpack.c.h.b16 %v218
  %v520 = vunpack.c.l.b16 %v219
  %v521 = vunpack.c.h.b16 %v219
  %v522 = vunpack.c.l.b16 %v220
  %v523 = vunpack.c.h.b16 %v220
  %v524 = vunpack.c.l.b16 %v221
  %v525 = vunpack.c.h.b16 %v221
  %v526 = vunpack.c.l.b16 %v222
  %v527 = vunpack.c.h.b16 %v222
  %v528 = vunpack.c.l.b16 %v223
  %v529 = vunpack.c.h.b16 %v223
  %v530 = vunpack.c.l.b16 %v224
  %v531 = vunpack.c.h.b16 %v224
  %v532 = vunpack.c.l.b16 %v225
  %v533 = vunpack.c.h.b16 %v225
  %v534 = vunpack.c.l.b16 %v226
  %v535 = vunpack.c.h.b16 %v226
  %v536 = vunpack.c.l.b16 %v227
  %v537 = vunpack.c.h.b16 %v227
  %v538 = vunpack.c.l.b16 %v228
  %v539 = vunpack.c.h.b16 %v228
  %v540 = vunpack.c.l.b16 %v229
  %v541 = vunpack.c.h.b16 %v229
  %v542 = vunpack.c.l.b16 %v230
  %v543 = vunpack.c.h.b16 %v230
  %v544 = vunpack.c.l.b16 %v231
  %v545 = vunpack.c.h.b16 %v231
  %v546 = vunpack.c.l.b16 %v232
  %v547 = vunpack.c.h.b16 %v232
  %v548 = vunpack.c.l.b16 %v233
  %v549 = vunpack.c.h.b16 %v233
  %v550 = vunpack.c.l.b16 %v234
  %v551 = vunpack.c.h.b16 %v234
  %v552 = vunpack.c.l.b16 %v235
  %v553 = vunpack.c.h.b16 %v235
  %v554 = vunpack.c.l.b16 %v236
  %v555 = vunpack.c.h.b16 %v236
  %v556 = vunpack.c.l.b16 %v237
  %v557 = vunpack.c.h.b16 %v237
  %v558 = vunpack.c.l.b16 %v238
  %v559 = vunpack.c.h.b16 %v238
  %v560 = vunpack.c.l.b16 %v239
  %v561 = vunpack.c.h.b16 %v239
  %v562 = vunpack.c.l.b16 %v240
  %v563 = vunpack.c.h.b16 %v240
  %v564 = vunpack.c.l.b16 %v241
  %v565 = vunpack.c.h.b16 %v241
  %v566 = vunpack.c.l.b16 %v242
  %v567 = vunpack.c.h.b16 %v242
  %v568 = vunpack.c.l.b16 %v243
  %v569 = vunpack.c.h.b16 %v243
  %v570 = vunpack.c.l.b16 %v244
  %v571 = vunpack.c.h.b16 %v244
  %v572 = vunpack.c.l.b16 %v245
  %v573 = vunpack.c.h.b16 %v245
  %v574 = vunpack.c.l.b16 %v246
  %v575 = vunpack.c.h.b16 %v246
  %v576 = vunpack.c.l.b16 %v247
  %v577 = vunpack.c.h.b16 %v247
  %v578 = vunpack.c.l.b16 %v248
  %v579 = vunpack.c.h.b16 %v248
  %v580 = vunpack.c.l.b16 %v249
  %v581 = vunpack.c.h.b16 %v249
  %v582 = vunpack.c.l.b16 %v250
  %v583 = vunpack.c.h.b16 %v250
  %v584 = vunpack.c.l.b16 %v251
  %v585 = vunpack.c.h.b16 %v251
  %v586 = vunpack.c.l.b16 %v252
  %v587 = vunpack.c.h.b16 %v252
  %v588 = vunpack.c.l.b16 %v253
  %v589 = vunpack.c.h.b16 %v253
  %v590 = vunpack.c.l.b16 %v254
  %v591 = vunpack.c.h.b16 %v254
  %v592 = vunpack.c.l.b16 %v255
  %v593 = vunpack.c.h.b16 %v255
  %v594 = vunpack.c.l.b16 %v256
  %v595 = vunpack.c.h.b16 %v256
  %v596 = vunpack.c.l.b16 %v257
  %v597 = vunpack.c.h.b16 %v257
  %v598 = vunpack.c.l.b16 %v258
  %v599 = vunpack.c.h.b16 %v258
  %v600 = vunpack.c.l.b16 %v259
  %v601 = vunpack.c.h.b16 %v259
  %v602 = vunpack.c.l.b16 %v260
  %v603 = vunpack.c.h.b16 %v260
  %v604 = vunpack.c.l.b16 %v261
  %v605 = vunpack.c.h.b16 %v261
  %v606 = vunpack.c.l.b16 %v262
  %v607 = vunpack.c.h.b16 %v262
  %v608 = vunpack.c.l.b16 %v263
  %v609 = vunpack.c.h.b16 %v263
  %v610 = vunpack.c.l.b16 %v264
  %v611 = vunpack.c.h.b16 %v264
  %v612 = vunpack.c.l.b16 %v265
  %v613 = vunpack.c.h.b16 %v265
  %v614 = vunpack.c.l.b16 %v266
  %v615 = vunpack.c.h.b16 %v266
  %v616 = vunpack.c.l.b16 %v267
  %v617 = vunpack.c.h.b16 %v267
  %v618 = vunpack.c.l.b16 %v268
  %v619 = vunpack.c.h.b16 %v268
  %v620 = vunpack.c.l.b16 %v269
  %v621 = vunpack.c.h.b16 %v269
  %v622 = vunpack.c.l.b16 %v270
  %v623 = vunpack.c.h.b16 %v270
  %v624 = vunpack.c.l.b16 %v271
  %v625 = vunpack.c.h.b16 %v271
  %v626 = vunpack.c.l.b16 %v272
  %v627 = vunpack.c.h.b16 %v272
  %v628 = vunpack.c.l.b16 %v273
  %v629 = vunpack.c.h.b16 %v273
  %v630 = vunpack.c.l.b16 %v274
  %v631 = vunpack.c.h.b16 %v274
  %v632 = vunpack.c.l.b16 %v275
  %v633 = vunpack.c.h.b16 %v275
  %v634 = vunpack.c.l.b16 %v276
  %v635 = vunpack.c.h.b16 %v276
  %v636 = vunpack.c.l.b16 %v277
  %v637 = vunpack.c.h.b16 %v277
  %v638 = vunpack.c.l.b16 %v278
  %v639 = vunpack.c.h.b16 %v278
  %v640 = vunpack.c.l.b16 %v279
  %v641 = vunpack.c.h.b16 %v279
  %v642 = vunpack.c.l.b16 %v280
  %v643 = vunpack.c.h.b16 %v280
  %v644 = vunpack.c.l.b16 %v281
  %v645 = vunpack.c.h.b16 %v281
  %v646 = vunpack.c.l.b16 %v282
  %v647 = vunpack.c.h.b16 %v282
  %v648 = vunpack.c.l.b16 %v283
  %v649 = vunpack.c.h.b16 %v283
  %v650 = vunpack.c.l.b16 %v284
  %v651 = vunpack.c.h.b16 %v284
  %v652 = vunpack.c.l.b16 %v285
  %v653 = vunpack.c.h.b16 %v285
  %v654 = vunpack.c.l.b16 %v286
  %v655 = vunpack.c.h.b16 %v286
  %v656 = vunpack.c.l.b16 %v287
  %v657 = vunpack.c.h.b16 %v287
  %v658 = vunpack.c.l.b16 %v288
  %v659 = vunpack.c.h.b16 %v288
  %v660 = vunpack.c.l.b16 %v289
  %v661 = vunpack.c.h.b16 %v289
  %v662 = vunpack.c.l.b16 %v290
  %v663 = vunpack.c.h.b16 %v290
  %v664 = vunpack.c.l.b16 %v291
  %v665 = vunpack.c.h.b16 %v291
  %v666 = vunpack.c.l.b16 %v292
  %v667 = vunpack.c.h.b16 %v292
  %v668 = vunpack.c.l.b16 %v293
  %v669 = vunpack.c.h.b16 %v293
  %v670 = vunpack.c.l.b16 %v294
  %v671 = vunpack.c.h.b16 %v294
  %v672 = vunpack.c.l.b16 %v295
  %v673 = vunpack.c.h.b16 %v295
  %v674 = vunpack.c.l.b16 %v296
  %v675 = vunpack.c.h.b16 %v296
  %v676 = vunpack.c.l.b16 %v297
  %v677 = vunpack.c.h.b16 %v297
  %v678 = vunpack.c.l.b16 %v298
  %v679 = vunpack.c.h.b16 %v298
  %v680 = vunpack.c.l.b16 %v299
  %v681 = vunpack.c.h.b16 %v299
  %v682 = vunpack.c.l.b16 %v300
  %v683 = vunpack.c.h.b16 %v300
  %v684 = vunpack.c.l.b16 %v301
  %v685 = vunpack.c.h.b16 %v301
  %v686 = vunpack.c.l.b16 %v302
  %v687 = vunpack.c.h.b16 %v302
  %v688 = vunpack.c.l.b16 %v303
  %v689 = vunpack.c.h.b16 %v303
  %v690 = vunpack.c.l.b16 %v304
  %v691 = vunpack.c.h.b16 %v304
  %v692 = vunpack.c.l.b16 %v305
  %v693 = vunpack.c.h.b16 %v305
  %v694 = vunpack.c.l.b16 %v306
  %v695 = vunpack.c.h.b16 %v306
  %v696 = vunpack.c.l.b16 %v307
  %v697 = vunpack.c.h.b16 %v307
  %v698 = vunpack.c.l.b16 %v308
  %v699 = vunpack.c.h.b16 %v308
  %v700 = vunpack.c.l.b16 %v309
  %v701 = vunpack.c.h.b16 %v309
  %v702 = vunpack.c.l.b16 %v310
  %v703 = vunpack.c.h.b16 %v310
  %v704 = vunpack.c.l.b16 %v311
  %v705 = vunpack.c.h.b16 %v311
  %v706 = vunpack.c.l.b16 %v312
  %v707 = vunpack.c.h.b16 %v312
  %v708 = vunpack.c.l.b16 %v313
  %v709 = vunpack.c.h.b16 %v313
  %v710 = vunpack.c.l.b16 %v314
  %v711 = vunpack.c.h.b16 %v314
  %v712 = vunpack.c.l.b16 %v315
  %v713 = vunpack.c.h.b16 %v315
  %v714 = vunpack.c.l.b16 %v316
  %v715 = vunpack.c.h.b16 %v316
  %v716 = vunpack.c.l.b16 %v317
  %v717 = vunpack.c.h.b16 %v317
  %v718 = vunpack.c.l.b16 %v318
  %v719 = vunpack.c.h.b16 %v318
  %v720 = vunpack.c.l.b16 %v319
  %v721 = vunpack.c.h.b16 %v319
  %v722 = vunpack.c.l.b16 %v320
  %v723 = vunpack.c.h.b16 %v320
  %v724 = vunpack.c.l.b16 %v321
  %v725 = vunpack.c.h.b16 %v321
  %v726 = vunpack.c.l.b16 %v322
  %v727 = vunpack.c.h.b16 %v322
  %v728 = vunpack.c.l.b16 %v323
  %v729 = vunpack.c.h.b16 %v323
  %v730 = vpack.c.b16 %v478, %v474
  %v731 = vpack.c.b16 %v479, %v475
  %v732 = vpack.c.b16 %v480, %v476
  %v733 = vpack.c.b16 %v481, %v477
  %v734 = vpack.c.b16 %v486, %v482
  %v735 = vpack.c.b16 %v487, %v483
  %v736 = vpack.c.b16 %v488, %v484
  %v737 = vpack.c.b16 %v489, %v485
  %v738 = vpack.c.b16 %v494, %v490
  %v739 = vpack.c.b16 %v495, %v491
  %v740 = vpack.c.b16 %v496, %v492
  %v741 = vpack.c.b16 %v497, %v493
  %v742 = vpack.c.b16 %v502, %v498
  %v743 = vpack.c.b16 %v503, %v499
  %v744 = vpack.c.b16 %v504, %v500
  %v745 = vpack.c.b16 %v505, %v501
  %v746 = vpack.c.b16 %v510, %v506
  %v747 = vpack.c.b16 %v511, %v507
  %v748 = vpack.c.b16 %v512, %v508
  %v749 = vpack.c.b16 %v513, %v509
  %v750 = vpack.c.b16 %v518, %v514
  %v751 = vpack.c.b16 %v519, %v515
  %v752 = vpack.c.b16 %v520, %v516
  %v753 = vpack.c.b16 %v521, %v517
  %v754 = vpack.c.b16 %v526, %v522
  %v755 = vpack.c.b16 %v527, %v523
  %v756 = vpack.c.b16 %v528, %v524
  %v757 = vpack.c.b16 %v529, %v525
  %v758 = vpack.c.b16 %v534, %v530
  %v759 = vpack.c.b16 %v535, %v531
  %v760 = vpack.c.b16 %v536, %v532
  %v761 = vpack.c.b16 %v537, %v533
  %v762 = vpack.c.b16 %v542, %v538
  %v763 = vpack.c.b16 %v543, %v539
  %v764 = vpack.c.b16 %v544, %v540
  %v765 = vpack.c.b16 %v545, %v541
  %v766 = vpack.c.b16 %v550, %v546
  %v767 = vpack.c.b16 %v551, %v547
  %v768 = vpack.c.b16 %v552, %v548
  %v769 = vpack.c.b16 %v553, %v549
  %v770 = vpack.c.b16 %v558, %v554
  %v771 = vpack.c.b16 %v559, %v555
  %v772 = vpack.c.b16 %v560, %v556
  %v773 = vpack.c.b16 %v561, %v557
  %v774 = vpack.c.b16 %v566, %v562
  %v775 = vpack.c.b16 %v567, %v563
  %v776 = vpack.c.b16 %v568, %v564
  %v777 = vpack.c.b16 %v569, %v565
  %v778 = vpack.c.b16 %v574, %v570
  %v779 = vpack.c.b16 %v575, %v571
  %v780 = vpack.c.b16 %v576, %v572
  %v781 = vpack.c.b16 %v577, %v573
  %v782 = vpack.c.b16 %v582, %v578
  %v783 = vpack.c.b16 %v583, %v579
  %v784 = vpack.c.b16 %v584, %v580
  %v785 = vpack.c.b16 %v585, %v581
  %v786 = vpack.c.b16 %v590, %v586
  %v787 = vpack.c.b16 %v591, %v587
  %v788 = vpack.c.b16 %v592, %v588
  %v789 = vpack.c.b16 %v593, %v589
  %v790 = vpack.c.b16 %v598, %v594
  %v791 = vpack.c.b16 %v599, %v595
  %v792 = vpack.c.b16 %v600, %v596
  %v793 = vpack.c.b16 %v601, %v597
  %v794 = vpack.c.b16 %v606, %v602
  %v795 = vpack.c.b16 %v607, %v603
  %v796 = vpack.c.b16 %v608, %v604
  %v797 = vpack.c.b16 %v609, %v605
  %v798 = vpack.c.b16 %v614, %v610
  %v799 = vpack.c.b16 %v615, %v611
  %v800 = vpack.c.b16 %v616, %v612
  %v801 = vpack.c.b16 %v617, %v613
  %v802 = vpack.c.b16 %v622, %v618
  %v803 = vpack.c.b16 %v623, %v619
  %v804 = vpack.c.b16 %v624, %v620
  %v805 = vpack.c.b16 %v625, %v621
  %v806 = vpack.c.b16 %v630, %v626
  %v807 = vpack.c.b16 %v631, %v627
  %v808 = vpack.c.b16 %v632, %v628
  %v809 = vpack.c.b16 %v633, %v629
  %v810 = vpack.c.b16 %v638, %v634
  %v811 = vpack.c.b16 %v639, %v635
  %v812 = vpack.c.b16 %v640, %v636
  %v813 = vpack.c.b16 %v641, %v637
  %v814 = vpack.c.b16 %v646, %v642
  %v815 = vpack.c.b16 %v647, %v643
  %v816 = vpack.c.b16 %v648, %v644
  %v817 = vpack.c.b16 %v649, %v645
  %v818 = vpack.c.b16 %v654, %v650
  %v819 = vpack.c.b16 %v655, %v651
  %v820 = vpack.c.b16 %v656, %v652
  %v821 = vpack.c.b16 %v657, %v653
  %v822 = vpack.c.b16 %v662, %v658
  %v823 = vpack.c.b16 %v663, %v659
  %v824 = vpack.c.b16 %v664, %v660
  %v825 = vpack.c.b16 %v665, %v661
  %v826 = vpack.c.b16 %v670, %v666
  %v827 = vpack.c.b16 %v671, %v667
  %v828 = vpack.c.b16 %v672, %v668
  %v829 = vpack.c.b16 %v673, %v669
  %v830 = vpack.c.b16 %v678, %v674
  %v831 = vpack.c.b16 %v679, %v675
  %v832 = vpack.c.b16 %v680, %v676
  %v833 = vpack.c.b16 %v681, %v677
  %v834 = vpack.c.b16 %v686, %v682
  %v835 = vpack.c.b16 %v687, %v683
  %v836 = vpack.c.b16 %v688, %v684
  %v837 = vpack.c.b16 %v689, %v685
  %v838 = vpack.c.b16 %v694, %v690
  %v839 = vpack.c.b16 %v695, %v691
  %v840 = vpack.c.b16 %v696, %v692
  %v841 = vpack.c.b16 %v697, %v693
  %v842 = vpack.c.b16 %v702, %v698
  %v843 = vpack.c.b16 %v703, %v699
  %v844 = vpack.c.b16 %v704, %v700
  %v845 = vpack.c.b16 %v705, %v701
  %v846 = vpack.c.b16 %v710, %v706
  %v847 = vpack.c.b16 %v711, %v707
  %v848 = vpack.c.b16 %v712, %v708
  %v849 = vpack.c.b16 %v713, %v709
  %v850 = vpack.c.b16 %v718, %v714
  %v851 = vpack.c.b16 %v719, %v715
  %v852 = vpack.c.b16 %v720, %v716
  %v853 = vpack.c.b16 %v721, %v717
  %v854 = vpack.c.b16 %v726, %v722
  %v855 = vpack.c.b16 %v727, %v723
  %v856 = vpack.c.b16 %v728, %v724
  %v857 = vpack.c.b16 %v729, %v725
  %986 = vmatprep.subr.bf16.mxu0 %v731
  %987 = vmatpush1.bf16.msra.mxu0 %v730
  %988 = vmatprep.subr.bf16.mxu0 %v735
  %989 = vmatpush1.bf16.msra.mxu0 %v734
  %990 = vmatprep.subr.bf16.mxu0 %v739
  %991 = vmatpush1.bf16.msra.mxu0 %v738
  %992 = vmatprep.subr.bf16.mxu0 %v743
  %993 = vmatpush1.bf16.msra.mxu0 %v742
  %994 = vmatprep.subr.bf16.mxu0 %v747
  %995 = vmatpush1.bf16.msra.mxu0 %v746
  %996 = vmatprep.subr.bf16.mxu0 %v751
  %997 = vmatpush1.bf16.msra.mxu0 %v750
  %998 = vmatprep.subr.bf16.mxu0 %v755
  %999 = vmatpush1.bf16.msra.mxu0 %v754
  %1000 = vmatprep.subr.bf16.mxu0 %v759
  %1001 = vmatpush1.bf16.msra.mxu0 %v758
  %1002 = vmatprep.subr.bf16.mxu0 %v763
  %1003 = vmatpush1.bf16.msra.mxu0 %v762
  %1004 = vmatprep.subr.bf16.mxu0 %v767
  %1005 = vmatpush1.bf16.msra.mxu0 %v766
  %1006 = vmatprep.subr.bf16.mxu0 %v771
  %1007 = vmatpush1.bf16.msra.mxu0 %v770
  %1008 = vmatprep.subr.bf16.mxu0 %v775
  %1009 = vmatpush1.bf16.msra.mxu0 %v774
  %1010 = vmatprep.subr.bf16.mxu0 %v779
  %1011 = vmatpush1.bf16.msra.mxu0 %v778
  %1012 = vmatprep.subr.bf16.mxu0 %v783
  %1013 = vmatpush1.bf16.msra.mxu0 %v782
  %1014 = vmatprep.subr.bf16.mxu0 %v787
  %1015 = vmatpush1.bf16.msra.mxu0 %v786
  %1016 = vmatprep.subr.bf16.mxu0 %v791
  %1017 = vmatpush1.bf16.msra.mxu0 %v790
  %1018 = vmatprep.mubr.bf16.mxu0 %v193
  %1019 = vmatmul.mubr.bf16.gmra.mrb[0].mxu0 %v192
  %v1020 = vpop.f32.mrb[0].mxu0
  %v1021 = vadd.f32 %v329, %v1020
  %v1022 = vpop.f32.mrb[0].mxu0
  %v1023 = vadd.f32 %v333, %v1022
  %v1024 = vpop.f32.mrb[0].mxu0
  %v1025 = vpop.f32.mrb[0].mxu0
  %1026 = vdwg.mxu0
  %1027 = vmatprep.subr.bf16.mxu0 %v795
  %1028 = vmatpush1.bf16.msra.mxu0 %v794
  %1029 = vmatprep.subr.bf16.mxu0 %v799
  %1030 = vmatpush1.bf16.msra.mxu0 %v798
  %1031 = vmatprep.subr.bf16.mxu0 %v803
  %1032 = vmatpush1.bf16.msra.mxu0 %v802
  %1033 = vmatprep.subr.bf16.mxu0 %v807
  %1034 = vmatpush1.bf16.msra.mxu0 %v806
  %1035 = vmatprep.subr.bf16.mxu0 %v811
  %1036 = vmatpush1.bf16.msra.mxu0 %v810
  %1037 = vmatprep.subr.bf16.mxu0 %v815
  %1038 = vmatpush1.bf16.msra.mxu0 %v814
  %1039 = vmatprep.subr.bf16.mxu0 %v819
  %1040 = vmatpush1.bf16.msra.mxu0 %v818
  %1041 = vmatprep.subr.bf16.mxu0 %v823
  %1042 = vmatpush1.bf16.msra.mxu0 %v822
  %1043 = vmatprep.subr.bf16.mxu0 %v827
  %1044 = vmatpush1.bf16.msra.mxu0 %v826
  %1045 = vmatprep.subr.bf16.mxu0 %v831
  %1046 = vmatpush1.bf16.msra.mxu0 %v830
  %1047 = vmatprep.subr.bf16.mxu0 %v835
  %1048 = vmatpush1.bf16.msra.mxu0 %v834
  %1049 = vmatprep.subr.bf16.mxu0 %v839
  %1050 = vmatpush1.bf16.msra.mxu0 %v838
  %1051 = vmatprep.subr.bf16.mxu0 %v843
  %1052 = vmatpush1.bf16.msra.mxu0 %v842
  %1053 = vmatprep.subr.bf16.mxu0 %v847
  %1054 = vmatpush1.bf16.msra.mxu0 %v846
  %1055 = vmatprep.subr.bf16.mxu0 %v851
  %1056 = vmatpush1.bf16.msra.mxu0 %v850
  %1057 = vmatprep.subr.bf16.mxu0 %v855
  %1058 = vmatpush1.bf16.msra.mxu0 %v854
  %1059 = vmatprep.mubr.bf16.mxu0 %v195
  %1060 = vmatmul.mubr.bf16.gmra.mrb[0].mxu0 %v194
  %v1061 = vpop.f32.mrb[0].mxu0
  %v1062 = vadd.f32 %v1021, %v1061
  %v1063 = vpop.f32.mrb[0].mxu0
  %v1064 = vadd.f32 %v1023, %v1063
  %v1065 = vpop.f32.mrb[0].mxu0
  %v1066 = vpop.f32.mrb[0].mxu0
  %1067 = vdwg.mxu0
  %1068 = vmatprep.subr.bf16.mxu0 %v733
  %1069 = vmatpush1.bf16.msra.mxu0 %v732
  %1070 = vmatprep.subr.bf16.mxu0 %v737
  %1071 = vmatpush1.bf16.msra.mxu0 %v736
  %1072 = vmatprep.subr.bf16.mxu0 %v741
  %1073 = vmatpush1.bf16.msra.mxu0 %v740
  %1074 = vmatprep.subr.bf16.mxu0 %v745
  %1075 = vmatpush1.bf16.msra.mxu0 %v744
  %1076 = vmatprep.subr.bf16.mxu0 %v749
  %1077 = vmatpush1.bf16.msra.mxu0 %v748
  %1078 = vmatprep.subr.bf16.mxu0 %v753
  %1079 = vmatpush1.bf16.msra.mxu0 %v752
  %1080 = vmatprep.subr.bf16.mxu0 %v757
  %1081 = vmatpush1.bf16.msra.mxu0 %v756
  %1082 = vmatprep.subr.bf16.mxu0 %v761
  %1083 = vmatpush1.bf16.msra.mxu0 %v760
  %1084 = vmatprep.subr.bf16.mxu0 %v765
  %1085 = vmatpush1.bf16.msra.mxu0 %v764
  %1086 = vmatprep.subr.bf16.mxu0 %v769
  %1087 = vmatpush1.bf16.msra.mxu0 %v768
  %1088 = vmatprep.subr.bf16.mxu0 %v773
  %1089 = vmatpush1.bf16.msra.mxu0 %v772
  %1090 = vmatprep.subr.bf16.mxu0 %v777
  %1091 = vmatpush1.bf16.msra.mxu0 %v776
  %1092 = vmatprep.subr.bf16.mxu0 %v781
  %1093 = vmatpush1.bf16.msra.mxu0 %v780
  %1094 = vmatprep.subr.bf16.mxu0 %v785
  %1095 = vmatpush1.bf16.msra.mxu0 %v784
  %1096 = vmatprep.subr.bf16.mxu0 %v789
  %1097 = vmatpush1.bf16.msra.mxu0 %v788
  %1098 = vmatprep.subr.bf16.mxu0 %v793
  %1099 = vmatpush1.bf16.msra.mxu0 %v792
  %1100 = vmatprep.mubr.bf16.mxu0 %v193
  %1101 = vmatmul.mubr.bf16.gmra.mrb[0].mxu0 %v192
  %v1102 = vpop.f32.mrb[0].mxu0
  %v1103 = vadd.f32 %v337, %v1102
  %v1104 = vpop.f32.mrb[0].mxu0
  %v1105 = vadd.f32 %v341, %v1104
  %v1106 = vpop.f32.mrb[0].mxu0
  %v1107 = vpop.f32.mrb[0].mxu0
  %1108 = vdwg.mxu0
  %1109 = vmatprep.subr.bf16.mxu0 %v797
  %1110 = vmatpush1.bf16.msra.mxu0 %v796
  %1111 = vmatprep.subr.bf16.mxu0 %v801
  %1112 = vmatpush1.bf16.msra.mxu0 %v800
  %1113 = vmatprep.subr.bf16.mxu0 %v805
  %1114 = vmatpush1.bf16.msra.mxu0 %v804
  %1115 = vmatprep.subr.bf16.mxu0 %v809
  %1116 = vmatpush1.bf16.msra.mxu0 %v808
  %1117 = vmatprep.subr.bf16.mxu0 %v813
  %1118 = vmatpush1.bf16.msra.mxu0 %v812
  %1119 = vmatprep.subr.bf16.mxu0 %v817
  %1120 = vmatpush1.bf16.msra.mxu0 %v816
  %1121 = vmatprep.subr.bf16.mxu0 %v821
  %1122 = vmatpush1.bf16.msra.mxu0 %v820
  %1123 = vmatprep.subr.bf16.mxu0 %v825
  %1124 = vmatpush1.bf16.msra.mxu0 %v824
  %1125 = vmatprep.subr.bf16.mxu0 %v829
  %1126 = vmatpush1.bf16.msra.mxu0 %v828
  %1127 = vmatprep.subr.bf16.mxu0 %v833
  %1128 = vmatpush1.bf16.msra.mxu0 %v832
  %1129 = vmatprep.subr.bf16.mxu0 %v837
  %1130 = vmatpush1.bf16.msra.mxu0 %v836
  %1131 = vmatprep.subr.bf16.mxu0 %v841
  %1132 = vmatpush1.bf16.msra.mxu0 %v840
  %1133 = vmatprep.subr.bf16.mxu0 %v845
  %1134 = vmatpush1.bf16.msra.mxu0 %v844
  %1135 = vmatprep.subr.bf16.mxu0 %v849
  %1136 = vmatpush1.bf16.msra.mxu0 %v848
  %1137 = vmatprep.subr.bf16.mxu0 %v853
  %1138 = vmatpush1.bf16.msra.mxu0 %v852
  %1139 = vmatprep.subr.bf16.mxu0 %v857
  %1140 = vmatpush1.bf16.msra.mxu0 %v856
  %1141 = vmatprep.mubr.bf16.mxu0 %v195
  %1142 = vmatmul.mubr.bf16.gmra.mrb[0].mxu0 %v194
  %v1143 = vpop.f32.mrb[0].mxu0
  %v1144 = vadd.f32 %v1103, %v1143
  %v1145 = vpop.f32.mrb[0].mxu0
  %v1146 = vadd.f32 %v1105, %v1145
  %v1147 = vpop.f32.mrb[0].mxu0
  %v1148 = vpop.f32.mrb[0].mxu0
  %1149 = vdwg.mxu0
  %v1150 = vmul.f32 %v1062, 0.2
  %v1151 = vmul.f32 %v1064, 0.2
  %v1152 = vmul.f32 %v1144, 0.2
  %v1153 = vmul.f32 %v1146, 0.2
  %v1154 = vmax.f32 %v1062, %v1150
  %v1155 = vmax.f32 %v1064, %v1151
  %v1156 = vmax.f32 %v1144, %v1152
  %v1157 = vmax.f32 %v1146, %v1153
  %v1158 = vpack.c.bf16 %v1154, %v1154
  %v1159 = vpack.c.bf16 %v1155, %v1155
  %v1160 = vpack.c.bf16 %v1156, %v1156
  %v1161 = vpack.c.bf16 %v1157, %v1157
  %v1162 = vld [vmem:[%s5] sm:$0xff]
  %v1163 = vld [vmem:[%s5 + $0x8] sm:$0xff]
  %v1164 = vld [vmem:[%s5 + $0x10] sm:$0xff]
  %v1165 = vld [vmem:[%s5 + $0x18] sm:$0xff]
  %v1166 = vld [vmem:[%s5 + $0x20] sm:$0xff]
  %v1167 = vld [vmem:[%s5 + $0x28] sm:$0xff]
  %v1168 = vld [vmem:[%s5 + $0x30] sm:$0xff]
  %v1169 = vld [vmem:[%s5 + $0x38] sm:$0xff]
  %v1170 = vld [vmem:[%s5 + $0x40] sm:$0xff]
  %v1171 = vld [vmem:[%s5 + $0x48] sm:$0xff]
  %v1172 = vld [vmem:[%s5 + $0x50] sm:$0xff]
  %v1173 = vld [vmem:[%s5 + $0x58] sm:$0xff]
  %v1174 = vld [vmem:[%s5 + $0x60] sm:$0xff]
  %v1175 = vld [vmem:[%s5 + $0x68] sm:$0xff]
  %v1176 = vld [vmem:[%s5 + $0x70] sm:$0xff]
  %v1177 = vld [vmem:[%s5 + $0x78] sm:$0xff]
  %v1178 = vld [vmem:[%s5 + $0x80] sm:$0xff]
  %v1179 = vld [vmem:[%s5 + $0x88] sm:$0xff]
  %v1180 = vld [vmem:[%s5 + $0x90] sm:$0xff]
  %v1181 = vld [vmem:[%s5 + $0x98] sm:$0xff]
  %v1182 = vld [vmem:[%s5 + $0xa0] sm:$0xff]
  %v1183 = vld [vmem:[%s5 + $0xa8] sm:$0xff]
  %v1184 = vld [vmem:[%s5 + $0xb0] sm:$0xff]
  %v1185 = vld [vmem:[%s5 + $0xb8] sm:$0xff]
  %v1186 = vld [vmem:[%s5 + $0xc0] sm:$0xff]
  %v1187 = vld [vmem:[%s5 + $0xc8] sm:$0xff]
  %v1188 = vld [vmem:[%s5 + $0xd0] sm:$0xff]
  %v1189 = vld [vmem:[%s5 + $0xd8] sm:$0xff]
  %v1190 = vld [vmem:[%s5 + $0xe0] sm:$0xff]
  %v1191 = vld [vmem:[%s5 + $0xe8] sm:$0xff]
  %v1192 = vld [vmem:[%s5 + $0xf0] sm:$0xff]
  %v1193 = vld [vmem:[%s5 + $0xf8] sm:$0xff]
  %v1194 = vld [vmem:[%s5 + $0x100] sm:$0xff]
  %v1195 = vld [vmem:[%s5 + $0x108] sm:$0xff]
  %v1196 = vld [vmem:[%s5 + $0x110] sm:$0xff]
  %v1197 = vld [vmem:[%s5 + $0x118] sm:$0xff]
  %v1198 = vld [vmem:[%s5 + $0x120] sm:$0xff]
  %v1199 = vld [vmem:[%s5 + $0x128] sm:$0xff]
  %v1200 = vld [vmem:[%s5 + $0x130] sm:$0xff]
  %v1201 = vld [vmem:[%s5 + $0x138] sm:$0xff]
  %v1202 = vld [vmem:[%s5 + $0x140] sm:$0xff]
  %v1203 = vld [vmem:[%s5 + $0x148] sm:$0xff]
  %v1204 = vld [vmem:[%s5 + $0x150] sm:$0xff]
  %v1205 = vld [vmem:[%s5 + $0x158] sm:$0xff]
  %v1206 = vld [vmem:[%s5 + $0x160] sm:$0xff]
  %v1207 = vld [vmem:[%s5 + $0x168] sm:$0xff]
  %v1208 = vld [vmem:[%s5 + $0x170] sm:$0xff]
  %v1209 = vld [vmem:[%s5 + $0x178] sm:$0xff]
  %v1210 = vld [vmem:[%s5 + $0x180] sm:$0xff]
  %v1211 = vld [vmem:[%s5 + $0x188] sm:$0xff]
  %v1212 = vld [vmem:[%s5 + $0x190] sm:$0xff]
  %v1213 = vld [vmem:[%s5 + $0x198] sm:$0xff]
  %v1214 = vld [vmem:[%s5 + $0x1a0] sm:$0xff]
  %v1215 = vld [vmem:[%s5 + $0x1a8] sm:$0xff]
  %v1216 = vld [vmem:[%s5 + $0x1b0] sm:$0xff]
  %v1217 = vld [vmem:[%s5 + $0x1b8] sm:$0xff]
  %v1218 = vld [vmem:[%s5 + $0x1c0] sm:$0xff]
  %v1219 = vld [vmem:[%s5 + $0x1c8] sm:$0xff]
  %v1220 = vld [vmem:[%s5 + $0x1d0] sm:$0xff]
  %v1221 = vld [vmem:[%s5 + $0x1d8] sm:$0xff]
  %v1222 = vld [vmem:[%s5 + $0x1e0] sm:$0xff]
  %v1223 = vld [vmem:[%s5 + $0x1e8] sm:$0xff]
  %v1224 = vld [vmem:[%s5 + $0x1f0] sm:$0xff]
  %v1225 = vld [vmem:[%s5 + $0x1f8] sm:$0xff]
  %v1226 = vld [vmem:[%s6] sm:$0x3]
  %v1228 = vlaneseq
  %v1229 = vshrl.u32 %v1228, 7
  %v1230 = vsub.s32 0, %v1229
  %v1231 = vrot.slane %v1226, %v1230
  %v1232 = vlaneseq
  %v1233 = vshrl.u32 %v1232, 7
  %v1234 = vsub.s32 1, %v1233
  %v1235 = vrot.slane %v1226, %v1234
  %v1302 = vunpack.c.l.b16 %v1162
  %v1303 = vunpack.c.h.b16 %v1162
  %v1304 = vunpack.c.l.b16 %v1163
  %v1305 = vunpack.c.h.b16 %v1163
  %v1306 = vunpack.c.l.b16 %v1164
  %v1307 = vunpack.c.h.b16 %v1164
  %v1308 = vunpack.c.l.b16 %v1165
  %v1309 = vunpack.c.h.b16 %v1165
  %v1310 = vunpack.c.l.b16 %v1166
  %v1311 = vunpack.c.h.b16 %v1166
  %v1312 = vunpack.c.l.b16 %v1167
  %v1313 = vunpack.c.h.b16 %v1167
  %v1314 = vunpack.c.l.b16 %v1168
  %v1315 = vunpack.c.h.b16 %v1168
  %v1316 = vunpack.c.l.b16 %v1169
  %v1317 = vunpack.c.h.b16 %v1169
  %v1318 = vunpack.c.l.b16 %v1170
  %v1319 = vunpack.c.h.b16 %v1170
  %v1320 = vunpack.c.l.b16 %v1171
  %v1321 = vunpack.c.h.b16 %v1171
  %v1322 = vunpack.c.l.b16 %v1172
  %v1323 = vunpack.c.h.b16 %v1172
  %v1324 = vunpack.c.l.b16 %v1173
  %v1325 = vunpack.c.h.b16 %v1173
  %v1326 = vunpack.c.l.b16 %v1174
  %v1327 = vunpack.c.h.b16 %v1174
  %v1328 = vunpack.c.l.b16 %v1175
  %v1329 = vunpack.c.h.b16 %v1175
  %v1330 = vunpack.c.l.b16 %v1176
  %v1331 = vunpack.c.h.b16 %v1176
  %v1332 = vunpack.c.l.b16 %v1177
  %v1333 = vunpack.c.h.b16 %v1177
  %v1334 = vunpack.c.l.b16 %v1178
  %v1335 = vunpack.c.h.b16 %v1178
  %v1336 = vunpack.c.l.b16 %v1179
  %v1337 = vunpack.c.h.b16 %v1179
  %v1338 = vunpack.c.l.b16 %v1180
  %v1339 = vunpack.c.h.b16 %v1180
  %v1340 = vunpack.c.l.b16 %v1181
  %v1341 = vunpack.c.h.b16 %v1181
  %v1342 = vunpack.c.l.b16 %v1182
  %v1343 = vunpack.c.h.b16 %v1182
  %v1344 = vunpack.c.l.b16 %v1183
  %v1345 = vunpack.c.h.b16 %v1183
  %v1346 = vunpack.c.l.b16 %v1184
  %v1347 = vunpack.c.h.b16 %v1184
  %v1348 = vunpack.c.l.b16 %v1185
  %v1349 = vunpack.c.h.b16 %v1185
  %v1350 = vunpack.c.l.b16 %v1186
  %v1351 = vunpack.c.h.b16 %v1186
  %v1352 = vunpack.c.l.b16 %v1187
  %v1353 = vunpack.c.h.b16 %v1187
  %v1354 = vunpack.c.l.b16 %v1188
  %v1355 = vunpack.c.h.b16 %v1188
  %v1356 = vunpack.c.l.b16 %v1189
  %v1357 = vunpack.c.h.b16 %v1189
  %v1358 = vunpack.c.l.b16 %v1190
  %v1359 = vunpack.c.h.b16 %v1190
  %v1360 = vunpack.c.l.b16 %v1191
  %v1361 = vunpack.c.h.b16 %v1191
  %v1362 = vunpack.c.l.b16 %v1192
  %v1363 = vunpack.c.h.b16 %v1192
  %v1364 = vunpack.c.l.b16 %v1193
  %v1365 = vunpack.c.h.b16 %v1193
  %v1366 = vunpack.c.l.b16 %v1194
  %v1367 = vunpack.c.h.b16 %v1194
  %v1368 = vunpack.c.l.b16 %v1195
  %v1369 = vunpack.c.h.b16 %v1195
  %v1370 = vunpack.c.l.b16 %v1196
  %v1371 = vunpack.c.h.b16 %v1196
  %v1372 = vunpack.c.l.b16 %v1197
  %v1373 = vunpack.c.h.b16 %v1197
  %v1374 = vunpack.c.l.b16 %v1198
  %v1375 = vunpack.c.h.b16 %v1198
  %v1376 = vunpack.c.l.b16 %v1199
  %v1377 = vunpack.c.h.b16 %v1199
  %v1378 = vunpack.c.l.b16 %v1200
  %v1379 = vunpack.c.h.b16 %v1200
  %v1380 = vunpack.c.l.b16 %v1201
  %v1381 = vunpack.c.h.b16 %v1201
  %v1382 = vunpack.c.l.b16 %v1202
  %v1383 = vunpack.c.h.b16 %v1202
  %v1384 = vunpack.c.l.b16 %v1203
  %v1385 = vunpack.c.h.b16 %v1203
  %v1386 = vunpack.c.l.b16 %v1204
  %v1387 = vunpack.c.h.b16 %v1204
  %v1388 = vunpack.c.l.b16 %v1205
  %v1389 = vunpack.c.h.b16 %v1205
  %v1390 = vunpack.c.l.b16 %v1206
  %v1391 = vunpack.c.h.b16 %v1206
  %v1392 = vunpack.c.l.b16 %v1207
  %v1393 = vunpack.c.h.b16 %v1207
  %v1394 = vunpack.c.l.b16 %v1208
  %v1395 = vunpack.c.h.b16 %v1208
  %v1396 = vunpack.c.l.b16 %v1209
  %v1397 = vunpack.c.h.b16 %v1209
  %v1398 = vunpack.c.l.b16 %v1210
  %v1399 = vunpack.c.h.b16 %v1210
  %v1400 = vunpack.c.l.b16 %v1211
  %v1401 = vunpack.c.h.b16 %v1211
  %v1402 = vunpack.c.l.b16 %v1212
  %v1403 = vunpack.c.h.b16 %v1212
  %v1404 = vunpack.c.l.b16 %v1213
  %v1405 = vunpack.c.h.b16 %v1213
  %v1406 = vunpack.c.l.b16 %v1214
  %v1407 = vunpack.c.h.b16 %v1214
  %v1408 = vunpack.c.l.b16 %v1215
  %v1409 = vunpack.c.h.b16 %v1215
  %v1410 = vunpack.c.l.b16 %v1216
  %v1411 = vunpack.c.h.b16 %v1216
  %v1412 = vunpack.c.l.b16 %v1217
  %v1413 = vunpack.c.h.b16 %v1217
  %v1414 = vunpack.c.l.b16 %v1218
  %v1415 = vunpack.c.h.b16 %v1218
  %v1416 = vunpack.c.l.b16 %v1219
  %v1417 = vunpack.c.h.b16 %v1219
  %v1418 = vunpack.c.l.b16 %v1220
  %v1419 = vunpack.c.h.b16 %v1220
  %v1420 = vunpack.c.l.b16 %v1221
  %v1421 = vunpack.c.h.b16 %v1221
  %v1422 = vunpack.c.l.b16 %v1222
  %v1423 = vunpack.c.h.b16 %v1222
  %v1424 = vunpack.c.l.b16 %v1223
  %v1425 = vunpack.c.h.b16 %v1223
  %v1426 = vunpack.c.l.b16 %v1224
  %v1427 = vunpack.c.h.b16 %v1224
  %v1428 = vunpack.c.l.b16 %v1225
  %v1429 = vunpack.c.h.b16 %v1225
  %v1430 = vpack.c.b16 %v1304, %v1302
  %v1431 = vpack.c.b16 %v1305, %v1303
  %v1432 = vpack.c.b16 %v1308, %v1306
  %v1433 = vpack.c.b16 %v1309, %v1307
  %v1434 = vpack.c.b16 %v1312, %v1310
  %v1435 = vpack.c.b16 %v1313, %v1311
  %v1436 = vpack.c.b16 %v1316, %v1314
  %v1437 = vpack.c.b16 %v1317, %v1315
  %v1438 = vpack.c.b16 %v1320, %v1318
  %v1439 = vpack.c.b16 %v1321, %v1319
  %v1440 = vpack.c.b16 %v1324, %v1322
  %v1441 = vpack.c.b16 %v1325, %v1323
  %v1442 = vpack.c.b16 %v1328, %v1326
  %v1443 = vpack.c.b16 %v1329, %v1327
  %v1444 = vpack.c.b16 %v1332, %v1330
  %v1445 = vpack.c.b16 %v1333, %v1331
  %v1446 = vpack.c.b16 %v1336, %v1334
  %v1447 = vpack.c.b16 %v1337, %v1335
  %v1448 = vpack.c.b16 %v1340, %v1338
  %v1449 = vpack.c.b16 %v1341, %v1339
  %v1450 = vpack.c.b16 %v1344, %v1342
  %v1451 = vpack.c.b16 %v1345, %v1343
  %v1452 = vpack.c.b16 %v1348, %v1346
  %v1453 = vpack.c.b16 %v1349, %v1347
  %v1454 = vpack.c.b16 %v1352, %v1350
  %v1455 = vpack.c.b16 %v1353, %v1351
  %v1456 = vpack.c.b16 %v1356, %v1354
  %v1457 = vpack.c.b16 %v1357, %v1355
  %v1458 = vpack.c.b16 %v1360, %v1358
  %v1459 = vpack.c.b16 %v1361, %v1359
  %v1460 = vpack.c.b16 %v1364, %v1362
  %v1461 = vpack.c.b16 %v1365, %v1363
  %v1462 = vpack.c.b16 %v1368, %v1366
  %v1463 = vpack.c.b16 %v1369, %v1367
  %v1464 = vpack.c.b16 %v1372, %v1370
  %v1465 = vpack.c.b16 %v1373, %v1371
  %v1466 = vpack.c.b16 %v1376, %v1374
  %v1467 = vpack.c.b16 %v1377, %v1375
  %v1468 = vpack.c.b16 %v1380, %v1378
  %v1469 = vpack.c.b16 %v1381, %v1379
  %v1470 = vpack.c.b16 %v1384, %v1382
  %v1471 = vpack.c.b16 %v1385, %v1383
  %v1472 = vpack.c.b16 %v1388, %v1386
  %v1473 = vpack.c.b16 %v1389, %v1387
  %v1474 = vpack.c.b16 %v1392, %v1390
  %v1475 = vpack.c.b16 %v1393, %v1391
  %v1476 = vpack.c.b16 %v1396, %v1394
  %v1477 = vpack.c.b16 %v1397, %v1395
  %v1478 = vpack.c.b16 %v1400, %v1398
  %v1479 = vpack.c.b16 %v1401, %v1399
  %v1480 = vpack.c.b16 %v1404, %v1402
  %v1481 = vpack.c.b16 %v1405, %v1403
  %v1482 = vpack.c.b16 %v1408, %v1406
  %v1483 = vpack.c.b16 %v1409, %v1407
  %v1484 = vpack.c.b16 %v1412, %v1410
  %v1485 = vpack.c.b16 %v1413, %v1411
  %v1486 = vpack.c.b16 %v1416, %v1414
  %v1487 = vpack.c.b16 %v1417, %v1415
  %v1488 = vpack.c.b16 %v1420, %v1418
  %v1489 = vpack.c.b16 %v1421, %v1419
  %v1490 = vpack.c.b16 %v1424, %v1422
  %v1491 = vpack.c.b16 %v1425, %v1423
  %v1492 = vpack.c.b16 %v1428, %v1426
  %v1493 = vpack.c.b16 %v1429, %v1427
  %1558 = vmatprep.subr.bf16.mxu0 %v1431
  %1559 = vmatpush1.bf16.msra.mxu0 %v1430
  %1560 = vmatprep.subr.bf16.mxu0 %v1433
  %1561 = vmatpush1.bf16.msra.mxu0 %v1432
  %1562 = vmatprep.subr.bf16.mxu0 %v1435
  %1563 = vmatpush1.bf16.msra.mxu0 %v1434
  %1564 = vmatprep.subr.bf16.mxu0 %v1437
  %1565 = vmatpush1.bf16.msra.mxu0 %v1436
  %1566 = vmatprep.subr.bf16.mxu0 %v1439
  %1567 = vmatpush1.bf16.msra.mxu0 %v1438
  %1568 = vmatprep.subr.bf16.mxu0 %v1441
  %1569 = vmatpush1.bf16.msra.mxu0 %v1440
  %1570 = vmatprep.subr.bf16.mxu0 %v1443
  %1571 = vmatpush1.bf16.msra.mxu0 %v1442
  %1572 = vmatprep.subr.bf16.mxu0 %v1445
  %1573 = vmatpush1.bf16.msra.mxu0 %v1444
  %1574 = vmatprep.subr.bf16.mxu0 %v1447
  %1575 = vmatpush1.bf16.msra.mxu0 %v1446
  %1576 = vmatprep.subr.bf16.mxu0 %v1449
  %1577 = vmatpush1.bf16.msra.mxu0 %v1448
  %1578 = vmatprep.subr.bf16.mxu0 %v1451
  %1579 = vmatpush1.bf16.msra.mxu0 %v1450
  %1580 = vmatprep.subr.bf16.mxu0 %v1453
  %1581 = vmatpush1.bf16.msra.mxu0 %v1452
  %1582 = vmatprep.subr.bf16.mxu0 %v1455
  %1583 = vmatpush1.bf16.msra.mxu0 %v1454
  %1584 = vmatprep.subr.bf16.mxu0 %v1457
  %1585 = vmatpush1.bf16.msra.mxu0 %v1456
  %1586 = vmatprep.subr.bf16.mxu0 %v1459
  %1587 = vmatpush1.bf16.msra.mxu0 %v1458
  %1588 = vmatprep.subr.bf16.mxu0 %v1461
  %1589 = vmatpush1.bf16.msra.mxu0 %v1460
  %1590 = vmatprep.mubr.bf16.mxu0 %v1159
  %1591 = vmatmul.mubr.bf16.gmra.mrb[0].mxu0 %v1158
  %v1592 = vpop.f32.mrb[0].mxu0
  %v1593 = vadd.f32 %v1231, %v1592
  %v1594 = vpop.f32.mrb[0].mxu0
  %v1595 = vadd.f32 %v1235, %v1594
  %v1596 = vpop.f32.mrb[0].mxu0
  %v1597 = vpop.f32.mrb[0].mxu0
  %1598 = vdwg.mxu0
  %1599 = vmatprep.subr.bf16.mxu0 %v1463
  %1600 = vmatpush1.bf16.msra.mxu0 %v1462
  %1601 = vmatprep.subr.bf16.mxu0 %v1465
  %1602 = vmatpush1.bf16.msra.mxu0 %v1464
  %1603 = vmatprep.subr.bf16.mxu0 %v1467
  %1604 = vmatpush1.bf16.msra.mxu0 %v1466
  %1605 = vmatprep.subr.bf16.mxu0 %v1469
  %1606 = vmatpush1.bf16.msra.mxu0 %v1468
  %1607 = vmatprep.subr.bf16.mxu0 %v1471
  %1608 = vmatpush1.bf16.msra.mxu0 %v1470
  %1609 = vmatprep.subr.bf16.mxu0 %v1473
  %1610 = vmatpush1.bf16.msra.mxu0 %v1472
  %1611 = vmatprep.subr.bf16.mxu0 %v1475
  %1612 = vmatpush1.bf16.msra.mxu0 %v1474
  %1613 = vmatprep.subr.bf16.mxu0 %v1477
  %1614 = vmatpush1.bf16.msra.mxu0 %v1476
  %1615 = vmatprep.subr.bf16.mxu0 %v1479
  %1616 = vmatpush1.bf16.msra.mxu0 %v1478
  %1617 = vmatprep.subr.bf16.mxu0 %v1481
  %1618 = vmatpush1.bf16.msra.mxu0 %v1480
  %1619 = vmatprep.subr.bf16.mxu0 %v1483
  %1620 = vmatpush1.bf16.msra.mxu0 %v1482
  %1621 = vmatprep.subr.bf16.mxu0 %v1485
  %1622 = vmatpush1.bf16.msra.mxu0 %v1484
  %1623 = vmatprep.subr.bf16.mxu0 %v1487
  %1624 = vmatpush1.bf16.msra.mxu0 %v1486
  %1625 = vmatprep.subr.bf16.mxu0 %v1489
  %1626 = vmatpush1.bf16.msra.mxu0 %v1488
  %1627 = vmatprep.subr.bf16.mxu0 %v1491
  %1628 = vmatpush1.bf16.msra.mxu0 %v1490
  %1629 = vmatprep.subr.bf16.mxu0 %v1493
  %1630 = vmatpush1.bf16.msra.mxu0 %v1492
  %1631 = vmatprep.mubr.bf16.mxu0 %v1161
  %1632 = vmatmul.mubr.bf16.gmra.mrb[0].mxu0 %v1160
  %v1633 = vpop.f32.mrb[0].mxu0
  %v1634 = vadd.f32 %v1593, %v1633
  %v1635 = vpop.f32.mrb[0].mxu0
  %v1636 = vadd.f32 %v1595, %v1635
  %v1637 = vpop.f32.mrb[0].mxu0
  %v1638 = vpop.f32.mrb[0].mxu0
  %1639 = vdwg.mxu0
  %v1640 = vtanh.pop %v1634
  %v1641 = vtanh.pop %v1636
  %1642 = vst [vmem:[%s7] sm:$0xff] %v1640
  %1643 = vst [vmem:[%s7 + $0x8] sm:$0xff] %v1641
  // Predicated region
  $region30: #{vposer_decoder_forward.1} parent=0 // pred_check
    _
  $region31: #{vposer_decoder_forward.1} parent=0 // pred_check_branch
    %1645 = sbr.rel (0) target = $region33
  $region32: #{vposer_decoder_forward.1} parent=0 // pred_region
    _
  $region33: #{vposer_decoder_forward.1} parent=0 // pred_fallthru
    _
  // Predicated region
  $region34: #{vposer_decoder_forward.1} parent=0 // pred_check
    _
  $region35: #{vposer_decoder_forward.1} parent=0 // pred_check_branch
    %1647 = sbr.rel (0) target = $region37
  $region36: #{vposer_decoder_forward.1} parent=0 // pred_region
    _
  $region37: #{vposer_decoder_forward.1} parent=0 // pred_fallthru
    _

</llo_original>
